<compile_context>
chip_gen: v6e
topology: v6e:2x2x1
jax: 0.10.0
libtpu: 0.0.40
codegen_flags: <defaults>
</compile_context>

<pallas_src>
import functools

import jax
import jax.numpy as jnp
from jax.experimental import pallas as pl
from jax.experimental.pallas import tpu as pltpu

_EPS = 1e-5                          # PyTorch BatchNorm2d default eps
_VMEM_LIMIT = 48 * 1024 * 1024       # <= ~48 MiB: safe on v7x (64 MiB physical VMEM)
_ACT_DTYPE = jnp.bfloat16            # activation storage dtype (all accumulation in f32)


# ------------------------------- small helpers -------------------------------

def _round_up(v, m):
    return (v + m - 1) // m * m


def _pick_tile(size, candidates):
    for c in candidates:
        if size % c == 0:
            return c
    return candidates[-1]


def _cpad(c):
    return _round_up(c, 128)


# ----------------------------- Pallas kernel bodies ---------------------------

def _matmul_stats_kernel(x_ref, w_ref, o_ref, stats_ref, acc_ref):
    # Tiled (tm, tn, tk) matmul: bf16 inputs, f32 accumulation in VMEM scratch.
    # On the last K step, also emit per-channel sum (row 0) and sum-of-squares (row 1)
    # of this output tile so BatchNorm stats never require re-reading y from HBM.
    @pl.when(pl.program_id(2) == 0)
    def _():
        acc_ref[...] = jnp.zeros_like(acc_ref)
        stats_ref[...] = jnp.zeros_like(stats_ref)

    acc_ref[...] += jnp.dot(x_ref[...], w_ref[...],
                            preferred_element_type=jnp.float32)

    @pl.when(pl.program_id(2) == pl.num_programs(2) - 1)
    def _():
        yb = acc_ref[...].astype(o_ref.dtype)
        o_ref[...] = yb
        yf = yb.astype(jnp.float32)
        stats_ref[0:1, :] = jnp.sum(yf, axis=0, keepdims=True)
        stats_ref[1:2, :] = jnp.sum(yf * yf, axis=0, keepdims=True)


def _bn_apply_kernel(x_ref, s_ref, b_ref, o_ref, *, relu):
    # y = x * scale + shift (+ ReLU); scale/shift fold the batch-norm statistics + affine.
    y = x_ref[...].astype(jnp.float32) * s_ref[...] + b_ref[...]
    if relu:
        y = jnp.maximum(y, 0.0)
    o_ref[...] = y.astype(o_ref.dtype)


def _bn_apply_add_relu_kernel(x_ref, s_ref, b_ref, r_ref, o_ref):
    # Bottleneck tail: BN scale/shift + residual add + ReLU, fused.
    y = x_ref[...].astype(jnp.float32) * s_ref[...] + b_ref[...]
    y = y + r_ref[...].astype(jnp.float32)
    o_ref[...] = jnp.maximum(y, 0.0).astype(o_ref.dtype)


def _max_taps_kernel(p_ref, o_ref, *, taps, c):
    # Max over `taps` channel-concatenated groups of width c (3x3 max-pool taps).
    acc = p_ref[:, 0:c]
    for t in range(1, taps):
        acc = jnp.maximum(acc, p_ref[:, t * c:(t + 1) * c])
    o_ref[...] = acc


def _avgpool_fc_kernel(x_ref, w_ref, b_ref, o_ref):
    # Fused adaptive-avg-pool (mean over spatial) + Linear head (f32, lane-padded).
    pooled = jnp.mean(x_ref[...].astype(jnp.float32), axis=1)     # (N, C)
    o_ref[...] = jnp.dot(pooled, w_ref[...],
                         preferred_element_type=jnp.float32) + b_ref[...]


# ---------------------------- pallas_call wrappers ----------------------------

def pallas_matmul_stats(x, w, out_dtype=_ACT_DTYPE):
    """x: (M, K) bf16; w: (Kp, Np) bf16 with Kp >= K, Kp % 128 == 0, Np % 128 == 0.
    Returns (y, stats):
      y     : (Mp, Np), Mp = round_up(M, 8); rows beyond M are exact zeros.
      stats : (grid_m * 8, Np) f32; per-M-tile rows [0]=sum, [1]=sum of squares."""
    m, k = x.shape
    kp, n = w.shape
    mp = _round_up(m, 8)
    if mp != m or kp != k:
        x = jnp.pad(x, ((0, mp - m), (0, kp - k)))
    x = x.astype(jnp.bfloat16)

    tm = _pick_tile(mp, (512, 256, 128, 64, 32, 16, 8))
    tn = _pick_tile(n, (256, 128))
    tk = kp if kp <= 1024 else _pick_tile(kp, (1024, 768, 512, 384, 256, 128))
    gm, gn, gk = mp // tm, n // tn, kp // tk

    y, stats = pl.pallas_call(
        _matmul_stats_kernel,
        out_shape=(jax.ShapeDtypeStruct((mp, n), out_dtype),
                   jax.ShapeDtypeStruct((gm * 8, n), jnp.float32)),
        grid_spec=pltpu.PrefetchScalarGridSpec(
            num_scalar_prefetch=0,
            grid=(gm, gn, gk),
            in_specs=[pl.BlockSpec((tm, tk), lambda i, j, kk: (i, kk)),
                      pl.BlockSpec((tk, tn), lambda i, j, kk: (kk, j))],
            out_specs=[pl.BlockSpec((tm, tn), lambda i, j, kk: (i, j)),
                       pl.BlockSpec((8, tn), lambda i, j, kk: (i, j))],
            scratch_shapes=[pltpu.VMEM((tm, tn), jnp.float32)]),
        compiler_params=pltpu.CompilerParams(
            dimension_semantics=("parallel", "parallel", "arbitrary"),
            vmem_limit_bytes=_VMEM_LIMIT),
    )(x, w)
    return y, stats


def _scale_shift_from_stats(stats, gamma, beta, true_rows, n_cols):
    """Fold per-tile sums into BN train-mode scale/shift (tiny (C,)-sized JAX glue)."""
    gm = stats.shape[0] // 8
    st = stats.reshape(gm, 8, n_cols)
    inv_n = 1.0 / float(true_rows)                 # zero-padded rows contribute nothing
    mean = jnp.sum(st[:, 0, :], axis=0, keepdims=True) * inv_n            # (1, C)
    var = jnp.maximum(jnp.sum(st[:, 1, :], axis=0, keepdims=True) * inv_n
                      - mean * mean, 0.0)                                 # biased var
    scale = gamma * jax.lax.rsqrt(var + _EPS)                             # (1, C)
    shift = beta - mean * scale                                           # (1, C)
    return scale, shift


def pallas_bn_apply(y, scale, shift, residual=None, relu=True):
    """Tiled y * scale + shift (+ residual) (+ ReLU). y: (Mp, C) bf16."""
    mp, c = y.shape
    tm = _pick_tile(mp, (512, 256, 128, 64, 32, 16, 8))
    row_spec = pl.BlockSpec((tm, c), lambda i: (i, 0))
    vec_spec = pl.BlockSpec((1, c), lambda i: (0, 0))
    if residual is None:
        kernel = functools.partial(_bn_apply_kernel, relu=relu)
        in_specs = [row_spec, vec_spec, vec_spec]
        args = (y, scale, shift)
    else:
        kernel = _bn_apply_add_relu_kernel
        in_specs = [row_spec, vec_spec, vec_spec, row_spec]
        args = (y, scale, shift, residual)
    return pl.pallas_call(
        kernel,
        out_shape=jax.ShapeDtypeStruct((mp, c), _ACT_DTYPE),
        grid_spec=pltpu.PrefetchScalarGridSpec(
            num_scalar_prefetch=0,
            grid=(mp // tm,),
            in_specs=in_specs,
            out_specs=row_spec),
        compiler_params=pltpu.CompilerParams(
            dimension_semantics=("parallel",),
            vmem_limit_bytes=_VMEM_LIMIT),
    )(*args)


# --------------------------------- layer glue ---------------------------------

def _im2col(x, kh, kw, stride, padding):
    n, h, w, c = x.shape
    ho = (h + 2 * padding - kh) // stride + 1
    wo = (w + 2 * padding - kw) // stride + 1
    if kh == 1 and kw == 1 and padding == 0:
        p = x if stride == 1 else x[:, ::stride, ::stride, :]
        patches = p.reshape(n * ho * wo, c)
    else:
        xp = jnp.pad(x, ((0, 0), (padding, padding), (padding, padding), (0, 0)))
        cols = [xp[:, di:di + (ho - 1) * stride + 1:stride,
                   dj:dj + (wo - 1) * stride + 1:stride, :]
                for di in range(kh) for dj in range(kw)]
        patches = jnp.concatenate(cols, axis=-1).reshape(n * ho * wo, kh * kw * c)
    return patches, (n, ho, wo)


@functools.partial(jax.jit, static_argnames=("kh", "kw", "stride", "padding", "relu"))
def conv_bn(x, slab, gamma, beta, residual=None, *,
            kh, kw, stride, padding, relu=True):
    """conv (im2col + tiled Pallas matmul w/ fused BN stats) + BN (+residual) (+ReLU)."""
    patches, (n, ho, wo) = _im2col(x, kh, kw, stride, padding)
    y, stats = pallas_matmul_stats(patches, slab)    # (Mp, Cout_pad); padded rows are zero
    m = n * ho * wo
    cpad = y.shape[1]
    scale, shift = _scale_shift_from_stats(stats, gamma, beta, m, cpad)
    res2d = None
    if residual is not None:
        res2d = residual.reshape(-1, cpad)
        if res2d.shape[0] != y.shape[0]:
            res2d = jnp.pad(res2d, ((0, y.shape[0] - res2d.shape[0]), (0, 0)))
    out = pallas_bn_apply(y, scale, shift, residual=res2d, relu=relu)
    if out.shape[0] != m:
        out = out[:m]
    return out.reshape(n, ho, wo, cpad)


@jax.jit
def max_pool_3x3_s2p1(x):
    n, h, w, c = x.shape
    ho = (h + 2 - 3) // 2 + 1
    wo = (w + 2 - 3) // 2 + 1
    # Zero spatial padding is equivalent to -inf here: the input is post-ReLU (>= 0).
    xp = jnp.pad(x, ((0, 0), (1, 1), (1, 1), (0, 0)))
    cols = [xp[:, di:di + (ho - 1) * 2 + 1:2, dj:dj + (wo - 1) * 2 + 1:2, :]
            for di in range(3) for dj in range(3)]
    patches = jnp.concatenate(cols, axis=-1).reshape(n * ho * wo, 9 * c)
    m = n * ho * wo
    mp = _round_up(m, 8)
    if mp != m:
        patches = jnp.pad(patches, ((0, mp - m), (0, 0)))
    tm = _pick_tile(mp, (512, 256, 128, 64, 32, 16, 8))
    out = pl.pallas_call(
        functools.partial(_max_taps_kernel, taps=9, c=c),
        out_shape=jax.ShapeDtypeStruct((mp, c), _ACT_DTYPE),
        grid_spec=pltpu.PrefetchScalarGridSpec(
            num_scalar_prefetch=0,
            grid=(mp // tm,),
            in_specs=[pl.BlockSpec((tm, 9 * c), lambda i: (i, 0))],
            out_specs=pl.BlockSpec((tm, c), lambda i: (i, 0))),
        compiler_params=pltpu.CompilerParams(
            dimension_semantics=("parallel",),
            vmem_limit_bytes=_VMEM_LIMIT),
    )(patches)
    if mp != m:
        out = out[:m]
    return out.reshape(n, ho, wo, c)


@functools.partial(jax.jit, static_argnames=("n_classes",))
def pallas_head(x, fc_w, fc_b, *, n_classes):
    n = x.shape[0]
    nout = fc_w.shape[1]                    # lane-padded class count (multiple of 128)
    out = pl.pallas_call(
        _avgpool_fc_kernel,
        out_shape=jax.ShapeDtypeStruct((n, nout), jnp.float32),
        compiler_params=pltpu.CompilerParams(vmem_limit_bytes=_VMEM_LIMIT),
    )(x, fc_w, fc_b)
    return out[:, :n_classes]


def bottleneck(x, p):
    s = p['stride']
    out = conv_bn(x, p['conv1_w'], *p['bn1'],
                  kh=1, kw=1, stride=1, padding=0, relu=True)
    out = conv_bn(out, p['conv2_w'], *p['bn2'],
                  kh=3, kw=3, stride=s, padding=1, relu=True)
    if 'down_w' in p:
        identity = conv_bn(x, p['down_w'], *p['down_bn'],
                           kh=1, kw=1, stride=s, padding=0, relu=False)
    else:
        identity = x
    return conv_bn(out, p['conv3_w'], *p['bn3'], residual=identity,
                   kh=1, kw=1, stride=1, padding=0, relu=True)


def single_resnet152_forward(params, x_nchw):
    x = jnp.transpose(x_nchw, (0, 2, 3, 1)).astype(_ACT_DTYPE)   # NCHW -> NHWC, bf16
    x = conv_bn(x, params['conv1_w'], *params['bn1'],
                kh=7, kw=7, stride=2, padding=3, relu=True)      # 7x7/2 stem
    x = max_pool_3x3_s2p1(x)
    for li in range(1, 5):
        for blk in params['layer%d' % li]:
            x = bottleneck(x, blk)
    n, h, w, c = x.shape
    return pallas_head(x.reshape(n, h * w, c), params['fc_w'], params['fc_b'],
                       n_classes=params['num_classes'])


# --------------------------- parameter construction ---------------------------

def make_resnet152_params(key):
    counter = [0]

    def nk():
        counter[0] += 1
        return jax.random.fold_in(key, counter[0])

    def conv_slab(cout, cin, kh, kw, cin_act):
        # Pre-transposed (kh*kw*cin_act, cpad(cout)) bf16 weight slab, K padded to 128.
        # cin_act = channel count of the (possibly channel-padded) incoming activation.
        std = (2.0 / (cin * kh * kw)) ** 0.5
        w = jax.random.normal(nk(), (cout, cin, kh, kw), jnp.float32) * std
        slab = jnp.transpose(w, (2, 3, 1, 0))                        # (kh, kw, cin, cout)
        slab = jnp.pad(slab, ((0, 0), (0, 0),
                              (0, cin_act - cin), (0, _cpad(cout) - cout)))
        slab = slab.reshape(kh * kw * cin_act, _cpad(cout))
        kp = _round_up(slab.shape[0], 128)
        if kp != slab.shape[0]:
            slab = jnp.pad(slab, ((0, kp - slab.shape[0]), (0, 0)))
        return slab.astype(jnp.bfloat16)

    def bn_p(c):
        cp = _cpad(c)
        gamma = jnp.zeros((1, cp), jnp.float32).at[0, :c].set(1.0)   # padded channels stay 0
        beta = jnp.zeros((1, cp), jnp.float32)
        return (gamma, beta)

    params = {'conv1_w': conv_slab(64, 3, 7, 7, cin_act=3), 'bn1': bn_p(64)}
    cfg = [(64, 3, 1), (128, 8, 2), (256, 36, 2), (512, 3, 2)]       # ResNet-152: [3, 8, 36, 3]
    expansion = 4
    inplanes = 64
    for li, (planes, blocks, stride) in enumerate(cfg, start=1):
        blk_list = []
        for b in range(blocks):
            s = stride if b == 0 else 1
            blk = {
                'stride': s,
                'conv1_w': conv_slab(planes, inplanes, 1, 1, cin_act=_cpad(inplanes)),
                'bn1': bn_p(planes),
                'conv2_w': conv_slab(planes, planes, 3, 3, cin_act=_cpad(planes)),
                'bn2': bn_p(planes),
                'conv3_w': conv_slab(planes * expansion, planes, 1, 1, cin_act=_cpad(planes)),
                'bn3': bn_p(planes * expansion),
            }
            if s != 1 or inplanes != planes * expansion:
                blk['down_w'] = conv_slab(planes * expansion, inplanes, 1, 1,
                                          cin_act=_cpad(inplanes))
                blk['down_bn'] = bn_p(planes * expansion)
            inplanes = planes * expansion
            blk_list.append(blk)
        params['layer%d' % li] = blk_list

    n_classes = 1000
    n_pad = _cpad(n_classes)                                         # 1024: lane-dense head
    fc_w = (jax.random.normal(nk(), (512 * expansion, n_classes), jnp.float32)
            * (1.0 / (512 * expansion)) ** 0.5)
    params['fc_w'] = jnp.pad(fc_w, ((0, 0), (0, n_pad - n_classes)))
    params['fc_b'] = jnp.zeros((1, n_pad), jnp.float32)
    params['num_classes'] = n_classes
    return params


if __name__ == "__main__":
    root = jax.random.PRNGKey(0)
    params = make_resnet152_params(jax.random.fold_in(root, 1))
    x = jax.random.normal(jax.random.fold_in(root, 2), (2, 3, 32, 32), jnp.float32)
    out = single_resnet152_forward(params, x)
    out = jax.block_until_ready(out)
    assert out.shape == (2, 1000) and out.dtype == jnp.float32
    print("KERNEL_OK")
</pallas_src>

<mosaic_0001>
module attributes {stable_mosaic.version = 11 : i64} {
  func.func @_matmul_stats_kernel(%arg0: i32, %arg1: i32, %arg2: i32, %arg3: memref<512x256xbf16, #tpu.memory_space<vmem>>, %arg4: memref<256x128xbf16, #tpu.memory_space<vmem>>, %arg5: memref<512x128xbf16, #tpu.memory_space<vmem>>, %arg6: memref<8x128xf32, #tpu.memory_space<vmem>>, %arg7: memref<512x128xf32, #tpu.memory_space<vmem>>) attributes {dimension_semantics = [#tpu.dimension_semantics<parallel>, #tpu.dimension_semantics<parallel>, #tpu.dimension_semantics<arbitrary>], iteration_bounds = array<i64: 1, 1, 1>, scalar_prefetch = 0 : i64, scratch_operands = 1 : i64, tpu.core_type = #tpu.core_type<tc>, window_params = [{transform_indices = @transform_0, window_bounds = array<i64: 512, 256>}, {transform_indices = @transform_1, window_bounds = array<i64: 256, 128>}, {transform_indices = @transform_2, window_bounds = array<i64: 512, 128>}, {transform_indices = @transform_3, window_bounds = array<i64: 8, 128>}]} {
    %c0_i32 = arith.constant 0 : i32
    %0 = arith.cmpi eq, %arg2, %c0_i32 : i32
    %1 = arith.extui %0 : i1 to i32
    %c0_i32_0 = arith.constant 0 : i32
    %2 = arith.cmpi ne, %1, %c0_i32_0 : i32
    scf.if %2 {
      %cst_10 = arith.constant 0.000000e+00 : f32
      %12 = vector.broadcast %cst_10 : f32 to vector<512x128xf32>
      %c0_11 = arith.constant 0 : index
      %c0_12 = arith.constant 0 : index
      %13 = vector.load %arg7[%c0_11, %c0_12] : memref<512x128xf32, #tpu.memory_space<vmem>>, vector<512x128xf32>
      tpu.vector_store %arg7[%c0_11, %c0_12], %12 {strides = array<i32>} : memref<512x128xf32, #tpu.memory_space<vmem>>, vector<512x128xf32>,
      %cst_13 = arith.constant 0.000000e+00 : f32
      %14 = vector.broadcast %cst_13 : f32 to vector<8x128xf32>
      %c0_14 = arith.constant 0 : index
      %c0_15 = arith.constant 0 : index
      %15 = vector.load %arg6[%c0_14, %c0_15] : memref<8x128xf32, #tpu.memory_space<vmem>>, vector<8x128xf32>
      tpu.vector_store %arg6[%c0_14, %c0_15], %14 {strides = array<i32>} : memref<8x128xf32, #tpu.memory_space<vmem>>, vector<8x128xf32>,
    } else {
    }
    %c0 = arith.constant 0 : index
    %c0_1 = arith.constant 0 : index
    %3 = vector.load %arg7[%c0, %c0_1] : memref<512x128xf32, #tpu.memory_space<vmem>>, vector<512x128xf32>
    %c0_2 = arith.constant 0 : index
    %c0_3 = arith.constant 0 : index
    %4 = vector.load %arg3[%c0_2, %c0_3] : memref<512x256xbf16, #tpu.memory_space<vmem>>, vector<512x256xbf16>
    %c0_4 = arith.constant 0 : index
    %c0_5 = arith.constant 0 : index
    %5 = vector.load %arg4[%c0_4, %c0_5] : memref<256x128xbf16, #tpu.memory_space<vmem>>, vector<256x128xbf16>
    %cst = arith.constant dense<0.000000e+00> : vector<512x128xf32>
    %6 = tpu.matmul %4, %5, %cst {dimension_numbers = #tpu.dot_dimension_numbers<[1], [0], [0], [1], [0, 0, 1, 1], [], []>} : vector<512x256xbf16>, vector<256x128xbf16>, vector<512x128xf32> -> vector<512x128xf32>
    %7 = arith.addf %3, %6 : vector<512x128xf32>
    %c0_6 = arith.constant 0 : index
    %c0_7 = arith.constant 0 : index
    %8 = vector.load %arg7[%c0_6, %c0_7] : memref<512x128xf32, #tpu.memory_space<vmem>>, vector<512x128xf32>
    tpu.vector_store %arg7[%c0_6, %c0_7], %7 {strides = array<i32>} : memref<512x128xf32, #tpu.memory_space<vmem>>, vector<512x128xf32>,
    %c0_i32_8 = arith.constant 0 : i32
    %9 = arith.cmpi eq, %arg2, %c0_i32_8 : i32
    %10 = arith.extui %9 : i1 to i32
    %c0_i32_9 = arith.constant 0 : i32
    %11 = arith.cmpi ne, %10, %c0_i32_9 : i32
    scf.if %11 {
      %c0_10 = arith.constant 0 : index
      %c0_11 = arith.constant 0 : index
      %12 = vector.load %arg7[%c0_10, %c0_11] : memref<512x128xf32, #tpu.memory_space<vmem>>, vector<512x128xf32>
      %13 = arith.truncf %12 : vector<512x128xf32> to vector<512x128xbf16>
      %c0_12 = arith.constant 0 : index
      %c0_13 = arith.constant 0 : index
      %14 = vector.load %arg5[%c0_12, %c0_13] : memref<512x128xbf16, #tpu.memory_space<vmem>>, vector<512x128xbf16>
      tpu.vector_store %arg5[%c0_12, %c0_13], %13 {strides = array<i32>} : memref<512x128xbf16, #tpu.memory_space<vmem>>, vector<512x128xbf16>,
      %15 = arith.extf %13 : vector<512x128xbf16> to vector<512x128xf32>
      %cst_14 = arith.constant dense<0.000000e+00> : vector<128xf32>
      %16 = vector.multi_reduction <add>, %15, %cst_14 [0] : vector<512x128xf32> to vector<128xf32>
      %17 = vector.shape_cast %16 : vector<128xf32> to vector<1x128xf32>
      %c0_15 = arith.constant 0 : index
      %c0_16 = arith.constant 0 : index
      %18 = vector.load %arg6[%c0_15, %c0_16] : memref<8x128xf32, #tpu.memory_space<vmem>>, vector<1x128xf32>
      tpu.vector_store %arg6[%c0_15, %c0_16], %17 {strides = array<i32>} : memref<8x128xf32, #tpu.memory_space<vmem>>, vector<1x128xf32>,
      %19 = arith.mulf %15, %15 : vector<512x128xf32>
      %cst_17 = arith.constant dense<0.000000e+00> : vector<128xf32>
      %20 = vector.multi_reduction <add>, %19, %cst_17 [0] : vector<512x128xf32> to vector<128xf32>
      %21 = vector.shape_cast %20 : vector<128xf32> to vector<1x128xf32>
      %c1 = arith.constant 1 : index
      %c0_18 = arith.constant 0 : index
      %22 = vector.load %arg6[%c1, %c0_18] : memref<8x128xf32, #tpu.memory_space<vmem>>, vector<1x128xf32>
      tpu.vector_store %arg6[%c1, %c0_18], %21 {strides = array<i32>} : memref<8x128xf32, #tpu.memory_space<vmem>>, vector<1x128xf32>,
    } else {
    }
    return
  }
  func.func @transform_0(%arg0: i32, %arg1: i32, %arg2: i32) -> (i32, i32) {
    %c0_i32 = arith.constant 0 : i32
    return %arg0, %arg2 : i32, i32
  }
  func.func @transform_1(%arg0: i32, %arg1: i32, %arg2: i32) -> (i32, i32) {
    %c0_i32 = arith.constant 0 : i32
    return %arg2, %arg1 : i32, i32
  }
  func.func @transform_2(%arg0: i32, %arg1: i32, %arg2: i32) -> (i32, i32) {
    %c0_i32 = arith.constant 0 : i32
    return %arg0, %arg1 : i32, i32
  }
  func.func @transform_3(%arg0: i32, %arg1: i32, %arg2: i32) -> (i32, i32) {
    %c0_i32 = arith.constant 0 : i32
    return %arg0, %arg1 : i32, i32
  }
}

module attributes {stable_mosaic.version = 11 : i64} {
  func.func @_bn_apply_kernel(%arg0: i32, %arg1: memref<512x128xbf16, #tpu.memory_space<vmem>>, %arg2: memref<1x128xf32, #tpu.memory_space<vmem>>, %arg3: memref<1x128xf32, #tpu.memory_space<vmem>>, %arg4: memref<512x128xbf16, #tpu.memory_space<vmem>>) attributes {dimension_semantics = [#tpu.dimension_semantics<parallel>], iteration_bounds = array<i64: 1>, scalar_prefetch = 0 : i64, scratch_operands = 0 : i64, tpu.core_type = #tpu.core_type<tc>, window_params = [{transform_indices = @transform_0, window_bounds = array<i64: 512, 128>}, {pipeline_mode = #tpu.pipeline_mode<synchronous>, transform_indices = @transform_1, window_bounds = array<i64: 1, 128>}, {pipeline_mode = #tpu.pipeline_mode<synchronous>, transform_indices = @transform_2, window_bounds = array<i64: 1, 128>}, {transform_indices = @transform_3, window_bounds = array<i64: 512, 128>}]} {
    %c0 = arith.constant 0 : index
    %c0_0 = arith.constant 0 : index
    %0 = vector.load %arg1[%c0, %c0_0] : memref<512x128xbf16, #tpu.memory_space<vmem>>, vector<512x128xbf16>
    %1 = arith.extf %0 : vector<512x128xbf16> to vector<512x128xf32>
    %c0_1 = arith.constant 0 : index
    %c0_2 = arith.constant 0 : index
    %2 = vector.load %arg2[%c0_1, %c0_2] : memref<1x128xf32, #tpu.memory_space<vmem>>, vector<1x128xf32>
    %3 = vector.broadcast %2 : vector<1x128xf32> to vector<512x128xf32>
    %4 = arith.mulf %1, %3 : vector<512x128xf32>
    %c0_3 = arith.constant 0 : index
    %c0_4 = arith.constant 0 : index
    %5 = vector.load %arg3[%c0_3, %c0_4] : memref<1x128xf32, #tpu.memory_space<vmem>>, vector<1x128xf32>
    %6 = vector.broadcast %5 : vector<1x128xf32> to vector<512x128xf32>
    %7 = arith.addf %4, %6 : vector<512x128xf32>
    %cst = arith.constant 0.000000e+00 : f32
    %8 = vector.broadcast %cst : f32 to vector<512x128xf32>
    %9 = arith.maximumf %7, %8 : vector<512x128xf32>
    %10 = arith.truncf %9 : vector<512x128xf32> to vector<512x128xbf16>
    %c0_5 = arith.constant 0 : index
    %c0_6 = arith.constant 0 : index
    %11 = vector.load %arg4[%c0_5, %c0_6] : memref<512x128xbf16, #tpu.memory_space<vmem>>, vector<512x128xbf16>
    tpu.vector_store %arg4[%c0_5, %c0_6], %10 {strides = array<i32>} : memref<512x128xbf16, #tpu.memory_space<vmem>>, vector<512x128xbf16>,
    return
  }
  func.func @transform_0(%arg0: i32) -> (i32, i32) {
    %c0_i32 = arith.constant 0 : i32
    %c0_i32_0 = arith.constant 0 : i32
    return %arg0, %c0_i32 : i32, i32
  }
  func.func @transform_1(%arg0: i32) -> (i32, i32) {
    %c0_i32 = arith.constant 0 : i32
    %c0_i32_0 = arith.constant 0 : i32
    %c0_i32_1 = arith.constant 0 : i32
    return %c0_i32, %c0_i32_0 : i32, i32
  }
  func.func @transform_2(%arg0: i32) -> (i32, i32) {
    %c0_i32 = arith.constant 0 : i32
    %c0_i32_0 = arith.constant 0 : i32
    %c0_i32_1 = arith.constant 0 : i32
    return %c0_i32, %c0_i32_0 : i32, i32
  }
  func.func @transform_3(%arg0: i32) -> (i32, i32) {
    %c0_i32 = arith.constant 0 : i32
    %c0_i32_0 = arith.constant 0 : i32
    return %arg0, %c0_i32 : i32, i32
  }
}

</mosaic_0001>

<llo_original>
// kernel: conv_bn.3
$region0: #{conv_bn.3}
  #allocation0 [shape = 'u32[]', space=smem, size = 0x4, offset = 0x4, fixed_abs, tag = 'smem constant byte address 0x4 - core index']
  #allocation1 [shape = 'u32[144,128]{1,0:T(1,128)}', space=vmem, size = 0x12000, scoped, tag = 'internal scratch']
  %s0 = inlined_call_operand.vmem [shape: bf16[512,128], index: 0, kind: input, shape index: {}]
  %s1 = inlined_call_operand.vmem [shape: f32[1,128], index: 1, kind: input, shape index: {}]
  %s2 = inlined_call_operand.vmem [shape: f32[1,128], index: 2, kind: input, shape index: {}]
  %s3 = inlined_call_operand.hbm [shape: bf16[512,128], index: 3, kind: output, shape index: {}]
  %s4 = sld [smem:[#allocation0]]
  $region22: #{conv_bn.3} parent=0
    _
  %s6 = ssub.s32 1, %s4
  %s7 = scalar_select 0, %s6, %s4
  $region1: #{conv_bn.3} parent=0
    #allocation2 [shape = 'u8[131072]{0}', space=vmem, size = 0x20000, scoped, tag = 'output window, operand 0, single buffered']
    #allocation3 [shape = 's32[1]{0}', space=sflag, size = 0x4, scoped, tag = 'scoped memory for conv_bn.3']
    %8 = vsyncpa [#allocation3], 0
    // Predicated region
    $region2: #{conv_bn.3} parent=1 // pred_check
      _
    $region3: #{conv_bn.3} parent=1 // pred_check_branch
      %10 = sbr.rel (0) target = $region5
    $region4: #{conv_bn.3} parent=1 // pred_region
      _
    $region5: #{conv_bn.3} parent=1 // pred_fallthru
      _
    // Predicated region
    $region6: #{conv_bn.3} parent=1 // pred_check
      _
    $region7: #{conv_bn.3} parent=1 // pred_check_branch
      %12 = sbr.rel (0) target = $region9
    $region8: #{conv_bn.3} parent=1 // pred_region
      _
    $region9: #{conv_bn.3} parent=1 // pred_fallthru
      _
    // Predicated region
    $region10: #{conv_bn.3} parent=1 // pred_check
      _
    $region11: #{conv_bn.3} parent=1 // pred_check_branch
      %14 = sbr.rel (0) target = $region13
    $region12: #{conv_bn.3} parent=1 // pred_region
      _
    $region13: #{conv_bn.3} parent=1 // pred_fallthru
      _
    %v15 = vld [vmem:[%s0] sm:$0xf]
    %v16 = vld [vmem:[%s0 + $0x4] sm:$0xf]
    %v17 = vld [vmem:[%s0 + $0x8] sm:$0xf]
    %v18 = vld [vmem:[%s0 + $0xc] sm:$0xf]
    %v19 = vld [vmem:[%s0 + $0x10] sm:$0xf]
    %v20 = vld [vmem:[%s0 + $0x14] sm:$0xf]
    %v21 = vld [vmem:[%s0 + $0x18] sm:$0xf]
    %v22 = vld [vmem:[%s0 + $0x1c] sm:$0xf]
    %v23 = vld [vmem:[%s0 + $0x20] sm:$0xf]
    %v24 = vld [vmem:[%s0 + $0x24] sm:$0xf]
    %v25 = vld [vmem:[%s0 + $0x28] sm:$0xf]
    %v26 = vld [vmem:[%s0 + $0x2c] sm:$0xf]
    %v27 = vld [vmem:[%s0 + $0x30] sm:$0xf]
    %v28 = vld [vmem:[%s0 + $0x34] sm:$0xf]
    %v29 = vld [vmem:[%s0 + $0x38] sm:$0xf]
    %v30 = vld [vmem:[%s0 + $0x3c] sm:$0xf]
    %v31 = vld [vmem:[%s0 + $0x40] sm:$0xf]
    %v32 = vld [vmem:[%s0 + $0x44] sm:$0xf]
    %v33 = vld [vmem:[%s0 + $0x48] sm:$0xf]
    %v34 = vld [vmem:[%s0 + $0x4c] sm:$0xf]
    %v35 = vld [vmem:[%s0 + $0x50] sm:$0xf]
    %v36 = vld [vmem:[%s0 + $0x54] sm:$0xf]
    %v37 = vld [vmem:[%s0 + $0x58] sm:$0xf]
    %v38 = vld [vmem:[%s0 + $0x5c] sm:$0xf]
    %v39 = vld [vmem:[%s0 + $0x60] sm:$0xf]
    %v40 = vld [vmem:[%s0 + $0x64] sm:$0xf]
    %v41 = vld [vmem:[%s0 + $0x68] sm:$0xf]
    %v42 = vld [vmem:[%s0 + $0x6c] sm:$0xf]
    %v43 = vld [vmem:[%s0 + $0x70] sm:$0xf]
    %v44 = vld [vmem:[%s0 + $0x74] sm:$0xf]
    %v45 = vld [vmem:[%s0 + $0x78] sm:$0xf]
    %v46 = vld [vmem:[%s0 + $0x7c] sm:$0xf]
    %v47 = vld [vmem:[%s0 + $0x80] sm:$0xf]
    %v48 = vld [vmem:[%s0 + $0x84] sm:$0xf]
    %v49 = vld [vmem:[%s0 + $0x88] sm:$0xf]
    %v50 = vld [vmem:[%s0 + $0x8c] sm:$0xf]
    %v51 = vld [vmem:[%s0 + $0x90] sm:$0xf]
    %v52 = vld [vmem:[%s0 + $0x94] sm:$0xf]
    %v53 = vld [vmem:[%s0 + $0x98] sm:$0xf]
    %v54 = vld [vmem:[%s0 + $0x9c] sm:$0xf]
    %v55 = vld [vmem:[%s0 + $0xa0] sm:$0xf]
    %v56 = vld [vmem:[%s0 + $0xa4] sm:$0xf]
    %v57 = vld [vmem:[%s0 + $0xa8] sm:$0xf]
    %v58 = vld [vmem:[%s0 + $0xac] sm:$0xf]
    %v59 = vld [vmem:[%s0 + $0xb0] sm:$0xf]
    %v60 = vld [vmem:[%s0 + $0xb4] sm:$0xf]
    %v61 = vld [vmem:[%s0 + $0xb8] sm:$0xf]
    %v62 = vld [vmem:[%s0 + $0xbc] sm:$0xf]
    %v63 = vld [vmem:[%s0 + $0xc0] sm:$0xf]
    %v64 = vld [vmem:[%s0 + $0xc4] sm:$0xf]
    %v65 = vld [vmem:[%s0 + $0xc8] sm:$0xf]
    %v66 = vld [vmem:[%s0 + $0xcc] sm:$0xf]
    %v67 = vld [vmem:[%s0 + $0xd0] sm:$0xf]
    %v68 = vld [vmem:[%s0 + $0xd4] sm:$0xf]
    %v69 = vld [vmem:[%s0 + $0xd8] sm:$0xf]
    %v70 = vld [vmem:[%s0 + $0xdc] sm:$0xf]
    %v71 = vld [vmem:[%s0 + $0xe0] sm:$0xf]
    %v72 = vld [vmem:[%s0 + $0xe4] sm:$0xf]
    %v73 = vld [vmem:[%s0 + $0xe8] sm:$0xf]
    %v74 = vld [vmem:[%s0 + $0xec] sm:$0xf]
    %v75 = vld [vmem:[%s0 + $0xf0] sm:$0xf]
    %v76 = vld [vmem:[%s0 + $0xf4] sm:$0xf]
    %v77 = vld [vmem:[%s0 + $0xf8] sm:$0xf]
    %v78 = vld [vmem:[%s0 + $0xfc] sm:$0xf]
    %v79 = vunpack.c.l.bf16 %v15
    %v80 = vunpack.c.l.bf16 %v16
    %v81 = vunpack.c.l.bf16 %v17
    %v82 = vunpack.c.l.bf16 %v18
    %v83 = vunpack.c.l.bf16 %v19
    %v84 = vunpack.c.l.bf16 %v20
    %v85 = vunpack.c.l.bf16 %v21
    %v86 = vunpack.c.l.bf16 %v22
    %v87 = vunpack.c.l.bf16 %v23
    %v88 = vunpack.c.l.bf16 %v24
    %v89 = vunpack.c.l.bf16 %v25
    %v90 = vunpack.c.l.bf16 %v26
    %v91 = vunpack.c.l.bf16 %v27
    %v92 = vunpack.c.l.bf16 %v28
    %v93 = vunpack.c.l.bf16 %v29
    %v94 = vunpack.c.l.bf16 %v30
    %v95 = vunpack.c.l.bf16 %v31
    %v96 = vunpack.c.l.bf16 %v32
    %v97 = vunpack.c.l.bf16 %v33
    %v98 = vunpack.c.l.bf16 %v34
    %v99 = vunpack.c.l.bf16 %v35
    %v100 = vunpack.c.l.bf16 %v36
    %v101 = vunpack.c.l.bf16 %v37
    %v102 = vunpack.c.l.bf16 %v38
    %v103 = vunpack.c.l.bf16 %v39
    %v104 = vunpack.c.l.bf16 %v40
    %v105 = vunpack.c.l.bf16 %v41
    %v106 = vunpack.c.l.bf16 %v42
    %v107 = vunpack.c.l.bf16 %v43
    %v108 = vunpack.c.l.bf16 %v44
    %v109 = vunpack.c.l.bf16 %v45
    %v110 = vunpack.c.l.bf16 %v46
    %v111 = vunpack.c.l.bf16 %v47
    %v112 = vunpack.c.l.bf16 %v48
    %v113 = vunpack.c.l.bf16 %v49
    %v114 = vunpack.c.l.bf16 %v50
    %v115 = vunpack.c.l.bf16 %v51
    %v116 = vunpack.c.l.bf16 %v52
    %v117 = vunpack.c.l.bf16 %v53
    %v118 = vunpack.c.l.bf16 %v54
    %v119 = vunpack.c.l.bf16 %v55
    %v120 = vunpack.c.l.bf16 %v56
    %v121 = vunpack.c.l.bf16 %v57
    %v122 = vunpack.c.l.bf16 %v58
    %v123 = vunpack.c.l.bf16 %v59
    %v124 = vunpack.c.l.bf16 %v60
    %v125 = vunpack.c.l.bf16 %v61
    %v126 = vunpack.c.l.bf16 %v62
    %v127 = vunpack.c.l.bf16 %v63
    %v128 = vunpack.c.l.bf16 %v64
    %v129 = vunpack.c.l.bf16 %v65
    %v130 = vunpack.c.l.bf16 %v66
    %v131 = vunpack.c.l.bf16 %v67
    %v132 = vunpack.c.l.bf16 %v68
    %v133 = vunpack.c.l.bf16 %v69
    %v134 = vunpack.c.l.bf16 %v70
    %v135 = vunpack.c.l.bf16 %v71
    %v136 = vunpack.c.l.bf16 %v72
    %v137 = vunpack.c.l.bf16 %v73
    %v138 = vunpack.c.l.bf16 %v74
    %v139 = vunpack.c.l.bf16 %v75
    %v140 = vunpack.c.l.bf16 %v76
    %v141 = vunpack.c.l.bf16 %v77
    %v142 = vunpack.c.l.bf16 %v78
    %v143 = vld [vmem:[%s1] sm:$0x1]
    %v145 = vlaneseq
    %v146 = vshrl.u32 %v145, 7
    %v147 = vsub.s32 0, %v146
    %v148 = vrot.slane %v143, %v147
    %v150 = vmul.f32 %v79, %v148
    %v151 = vmul.f32 %v80, %v148
    %v152 = vmul.f32 %v81, %v148
    %v153 = vmul.f32 %v82, %v148
    %v154 = vmul.f32 %v83, %v148
    %v155 = vmul.f32 %v84, %v148
    %v156 = vmul.f32 %v85, %v148
    %v157 = vmul.f32 %v86, %v148
    %v158 = vmul.f32 %v87, %v148
    %v159 = vmul.f32 %v88, %v148
    %v160 = vmul.f32 %v89, %v148
    %v161 = vmul.f32 %v90, %v148
    %v162 = vmul.f32 %v91, %v148
    %v163 = vmul.f32 %v92, %v148
    %v164 = vmul.f32 %v93, %v148
    %v165 = vmul.f32 %v94, %v148
    %v166 = vmul.f32 %v95, %v148
    %v167 = vmul.f32 %v96, %v148
    %v168 = vmul.f32 %v97, %v148
    %v169 = vmul.f32 %v98, %v148
    %v170 = vmul.f32 %v99, %v148
    %v171 = vmul.f32 %v100, %v148
    %v172 = vmul.f32 %v101, %v148
    %v173 = vmul.f32 %v102, %v148
    %v174 = vmul.f32 %v103, %v148
    %v175 = vmul.f32 %v104, %v148
    %v176 = vmul.f32 %v105, %v148
    %v177 = vmul.f32 %v106, %v148
    %v178 = vmul.f32 %v107, %v148
    %v179 = vmul.f32 %v108, %v148
    %v180 = vmul.f32 %v109, %v148
    %v181 = vmul.f32 %v110, %v148
    %v182 = vmul.f32 %v111, %v148
    %v183 = vmul.f32 %v112, %v148
    %v184 = vmul.f32 %v113, %v148
    %v185 = vmul.f32 %v114, %v148
    %v186 = vmul.f32 %v115, %v148
    %v187 = vmul.f32 %v116, %v148
    %v188 = vmul.f32 %v117, %v148
    %v189 = vmul.f32 %v118, %v148
    %v190 = vmul.f32 %v119, %v148
    %v191 = vmul.f32 %v120, %v148
    %v192 = vmul.f32 %v121, %v148
    %v193 = vmul.f32 %v122, %v148
    %v194 = vmul.f32 %v123, %v148
    %v195 = vmul.f32 %v124, %v148
    %v196 = vmul.f32 %v125, %v148
    %v197 = vmul.f32 %v126, %v148
    %v198 = vmul.f32 %v127, %v148
    %v199 = vmul.f32 %v128, %v148
    %v200 = vmul.f32 %v129, %v148
    %v201 = vmul.f32 %v130, %v148
    %v202 = vmul.f32 %v131, %v148
    %v203 = vmul.f32 %v132, %v148
    %v204 = vmul.f32 %v133, %v148
    %v205 = vmul.f32 %v134, %v148
    %v206 = vmul.f32 %v135, %v148
    %v207 = vmul.f32 %v136, %v148
    %v208 = vmul.f32 %v137, %v148
    %v209 = vmul.f32 %v138, %v148
    %v210 = vmul.f32 %v139, %v148
    %v211 = vmul.f32 %v140, %v148
    %v212 = vmul.f32 %v141, %v148
    %v213 = vmul.f32 %v142, %v148
    %v214 = vld [vmem:[%s2] sm:$0x1]
    %v216 = vlaneseq
    %v217 = vshrl.u32 %v216, 7
    %v218 = vsub.s32 0, %v217
    %v219 = vrot.slane %v214, %v218
    %v221 = vadd.f32 %v150, %v219
    %v222 = vadd.f32 %v151, %v219
    %v223 = vadd.f32 %v152, %v219
    %v224 = vadd.f32 %v153, %v219
    %v225 = vadd.f32 %v154, %v219
    %v226 = vadd.f32 %v155, %v219
    %v227 = vadd.f32 %v156, %v219
    %v228 = vadd.f32 %v157, %v219
    %v229 = vadd.f32 %v158, %v219
    %v230 = vadd.f32 %v159, %v219
    %v231 = vadd.f32 %v160, %v219
    %v232 = vadd.f32 %v161, %v219
    %v233 = vadd.f32 %v162, %v219
    %v234 = vadd.f32 %v163, %v219
    %v235 = vadd.f32 %v164, %v219
    %v236 = vadd.f32 %v165, %v219
    %v237 = vadd.f32 %v166, %v219
    %v238 = vadd.f32 %v167, %v219
    %v239 = vadd.f32 %v168, %v219
    %v240 = vadd.f32 %v169, %v219
    %v241 = vadd.f32 %v170, %v219
    %v242 = vadd.f32 %v171, %v219
    %v243 = vadd.f32 %v172, %v219
    %v244 = vadd.f32 %v173, %v219
    %v245 = vadd.f32 %v174, %v219
    %v246 = vadd.f32 %v175, %v219
    %v247 = vadd.f32 %v176, %v219
    %v248 = vadd.f32 %v177, %v219
    %v249 = vadd.f32 %v178, %v219
    %v250 = vadd.f32 %v179, %v219
    %v251 = vadd.f32 %v180, %v219
    %v252 = vadd.f32 %v181, %v219
    %v253 = vadd.f32 %v182, %v219
    %v254 = vadd.f32 %v183, %v219
    %v255 = vadd.f32 %v184, %v219
    %v256 = vadd.f32 %v185, %v219
    %v257 = vadd.f32 %v186, %v219
    %v258 = vadd.f32 %v187, %v219
    %v259 = vadd.f32 %v188, %v219
    %v260 = vadd.f32 %v189, %v219
    %v261 = vadd.f32 %v190, %v219
    %v262 = vadd.f32 %v191, %v219
    %v263 = vadd.f32 %v192, %v219
    %v264 = vadd.f32 %v193, %v219
    %v265 = vadd.f32 %v194, %v219
    %v266 = vadd.f32 %v195, %v219
    %v267 = vadd.f32 %v196, %v219
    %v268 = vadd.f32 %v197, %v219
    %v269 = vadd.f32 %v198, %v219
    %v270 = vadd.f32 %v199, %v219
    %v271 = vadd.f32 %v200, %v219
    %v272 = vadd.f32 %v201, %v219
    %v273 = vadd.f32 %v202, %v219
    %v274 = vadd.f32 %v203, %v219
    %v275 = vadd.f32 %v204, %v219
    %v276 = vadd.f32 %v205, %v219
    %v277 = vadd.f32 %v206, %v219
    %v278 = vadd.f32 %v207, %v219
    %v279 = vadd.f32 %v208, %v219
    %v280 = vadd.f32 %v209, %v219
    %v281 = vadd.f32 %v210, %v219
    %v282 = vadd.f32 %v211, %v219
    %v283 = vadd.f32 %v212, %v219
    %v284 = vadd.f32 %v213, %v219
    %v285 = vmax.f32 %v221, 0.0
    %v286 = vmax.f32 %v222, 0.0
    %v287 = vmax.f32 %v223, 0.0
    %v288 = vmax.f32 %v224, 0.0
    %v289 = vmax.f32 %v225, 0.0
    %v290 = vmax.f32 %v226, 0.0
    %v291 = vmax.f32 %v227, 0.0
    %v292 = vmax.f32 %v228, 0.0
    %v293 = vmax.f32 %v229, 0.0
    %v294 = vmax.f32 %v230, 0.0
    %v295 = vmax.f32 %v231, 0.0
    %v296 = vmax.f32 %v232, 0.0
    %v297 = vmax.f32 %v233, 0.0
    %v298 = vmax.f32 %v234, 0.0
    %v299 = vmax.f32 %v235, 0.0
    %v300 = vmax.f32 %v236, 0.0
    %v301 = vmax.f32 %v237, 0.0
    %v302 = vmax.f32 %v238, 0.0
    %v303 = vmax.f32 %v239, 0.0
    %v304 = vmax.f32 %v240, 0.0
    %v305 = vmax.f32 %v241, 0.0
    %v306 = vmax.f32 %v242, 0.0
    %v307 = vmax.f32 %v243, 0.0
    %v308 = vmax.f32 %v244, 0.0
    %v309 = vmax.f32 %v245, 0.0
    %v310 = vmax.f32 %v246, 0.0
    %v311 = vmax.f32 %v247, 0.0
    %v312 = vmax.f32 %v248, 0.0
    %v313 = vmax.f32 %v249, 0.0
    %v314 = vmax.f32 %v250, 0.0
    %v315 = vmax.f32 %v251, 0.0
    %v316 = vmax.f32 %v252, 0.0
    %v317 = vmax.f32 %v253, 0.0
    %v318 = vmax.f32 %v254, 0.0
    %v319 = vmax.f32 %v255, 0.0
    %v320 = vmax.f32 %v256, 0.0
    %v321 = vmax.f32 %v257, 0.0
    %v322 = vmax.f32 %v258, 0.0
    %v323 = vmax.f32 %v259, 0.0
    %v324 = vmax.f32 %v260, 0.0
    %v325 = vmax.f32 %v261, 0.0
    %v326 = vmax.f32 %v262, 0.0
    %v327 = vmax.f32 %v263, 0.0
    %v328 = vmax.f32 %v264, 0.0
    %v329 = vmax.f32 %v265, 0.0
    %v330 = vmax.f32 %v266, 0.0
    %v331 = vmax.f32 %v267, 0.0
    %v332 = vmax.f32 %v268, 0.0
    %v333 = vmax.f32 %v269, 0.0
    %v334 = vmax.f32 %v270, 0.0
    %v335 = vmax.f32 %v271, 0.0
    %v336 = vmax.f32 %v272, 0.0
    %v337 = vmax.f32 %v273, 0.0
    %v338 = vmax.f32 %v274, 0.0
    %v339 = vmax.f32 %v275, 0.0
    %v340 = vmax.f32 %v276, 0.0
    %v341 = vmax.f32 %v277, 0.0
    %v342 = vmax.f32 %v278, 0.0
    %v343 = vmax.f32 %v279, 0.0
    %v344 = vmax.f32 %v280, 0.0
    %v345 = vmax.f32 %v281, 0.0
    %v346 = vmax.f32 %v282, 0.0
    %v347 = vmax.f32 %v283, 0.0
    %v348 = vmax.f32 %v284, 0.0
    %v349 = vpack.c.bf16 %v286, %v285
    %v350 = vpack.c.bf16 %v288, %v287
    %v351 = vpack.c.bf16 %v290, %v289
    %v352 = vpack.c.bf16 %v292, %v291
    %v353 = vpack.c.bf16 %v294, %v293
    %v354 = vpack.c.bf16 %v296, %v295
    %v355 = vpack.c.bf16 %v298, %v297
    %v356 = vpack.c.bf16 %v300, %v299
    %v357 = vpack.c.bf16 %v302, %v301
    %v358 = vpack.c.bf16 %v304, %v303
    %v359 = vpack.c.bf16 %v306, %v305
    %v360 = vpack.c.bf16 %v308, %v307
    %v361 = vpack.c.bf16 %v310, %v309
    %v362 = vpack.c.bf16 %v312, %v311
    %v363 = vpack.c.bf16 %v314, %v313
    %v364 = vpack.c.bf16 %v316, %v315
    %v365 = vpack.c.bf16 %v318, %v317
    %v366 = vpack.c.bf16 %v320, %v319
    %v367 = vpack.c.bf16 %v322, %v321
    %v368 = vpack.c.bf16 %v324, %v323
    %v369 = vpack.c.bf16 %v326, %v325
    %v370 = vpack.c.bf16 %v328, %v327
    %v371 = vpack.c.bf16 %v330, %v329
    %v372 = vpack.c.bf16 %v332, %v331
    %v373 = vpack.c.bf16 %v334, %v333
    %v374 = vpack.c.bf16 %v336, %v335
    %v375 = vpack.c.bf16 %v338, %v337
    %v376 = vpack.c.bf16 %v340, %v339
    %v377 = vpack.c.bf16 %v342, %v341
    %v378 = vpack.c.bf16 %v344, %v343
    %v379 = vpack.c.bf16 %v346, %v345
    %v380 = vpack.c.bf16 %v348, %v347
    %v413 = vunpack.c.l.b16 %v349
    %v414 = vunpack.c.h.b16 %v349
    %v415 = vunpack.c.l.b16 %v350
    %v416 = vunpack.c.h.b16 %v350
    %v417 = vunpack.c.l.b16 %v351
    %v418 = vunpack.c.h.b16 %v351
    %v419 = vunpack.c.l.b16 %v352
    %v420 = vunpack.c.h.b16 %v352
    %v421 = vunpack.c.l.b16 %v353
    %v422 = vunpack.c.h.b16 %v353
    %v423 = vunpack.c.l.b16 %v354
    %v424 = vunpack.c.h.b16 %v354
    %v425 = vunpack.c.l.b16 %v355
    %v426 = vunpack.c.h.b16 %v355
    %v427 = vunpack.c.l.b16 %v356
    %v428 = vunpack.c.h.b16 %v356
    %v429 = vunpack.c.l.b16 %v357
    %v430 = vunpack.c.h.b16 %v357
    %v431 = vunpack.c.l.b16 %v358
    %v432 = vunpack.c.h.b16 %v358
    %v433 = vunpack.c.l.b16 %v359
    %v434 = vunpack.c.h.b16 %v359
    %v435 = vunpack.c.l.b16 %v360
    %v436 = vunpack.c.h.b16 %v360
    %v437 = vunpack.c.l.b16 %v361
    %v438 = vunpack.c.h.b16 %v361
    %v439 = vunpack.c.l.b16 %v362
    %v440 = vunpack.c.h.b16 %v362
    %v441 = vunpack.c.l.b16 %v363
    %v442 = vunpack.c.h.b16 %v363
    %v443 = vunpack.c.l.b16 %v364
    %v444 = vunpack.c.h.b16 %v364
    %v445 = vunpack.c.l.b16 %v365
    %v446 = vunpack.c.h.b16 %v365
    %v447 = vunpack.c.l.b16 %v366
    %v448 = vunpack.c.h.b16 %v366
    %v449 = vunpack.c.l.b16 %v367
    %v450 = vunpack.c.h.b16 %v367
    %v451 = vunpack.c.l.b16 %v368
    %v452 = vunpack.c.h.b16 %v368
    %v453 = vunpack.c.l.b16 %v369
    %v454 = vunpack.c.h.b16 %v369
    %v455 = vunpack.c.l.b16 %v370
    %v456 = vunpack.c.h.b16 %v370
    %v457 = vunpack.c.l.b16 %v371
    %v458 = vunpack.c.h.b16 %v371
    %v459 = vunpack.c.l.b16 %v372
    %v460 = vunpack.c.h.b16 %v372
    %v461 = vunpack.c.l.b16 %v373
    %v462 = vunpack.c.h.b16 %v373
    %v463 = vunpack.c.l.b16 %v374
    %v464 = vunpack.c.h.b16 %v374
    %v465 = vunpack.c.l.b16 %v375
    %v466 = vunpack.c.h.b16 %v375
    %v467 = vunpack.c.l.b16 %v376
    %v468 = vunpack.c.h.b16 %v376
    %v469 = vunpack.c.l.b16 %v377
    %v470 = vunpack.c.h.b16 %v377
    %v471 = vunpack.c.l.b16 %v378
    %v472 = vunpack.c.h.b16 %v378
    %v473 = vunpack.c.l.b16 %v379
    %v474 = vunpack.c.h.b16 %v379
    %v475 = vunpack.c.l.b16 %v380
    %v476 = vunpack.c.h.b16 %v380
    %v477 = vpack.c.b16 %v413, %v413
    %v478 = vpack.c.b16 %v414, %v414
    %v479 = vpack.c.b16 %v415, %v415
    %v480 = vpack.c.b16 %v416, %v416
    %v481 = vpack.c.b16 %v417, %v417
    %v482 = vpack.c.b16 %v418, %v418
    %v483 = vpack.c.b16 %v419, %v419
    %v484 = vpack.c.b16 %v420, %v420
    %v485 = vpack.c.b16 %v421, %v421
    %v486 = vpack.c.b16 %v422, %v422
    %v487 = vpack.c.b16 %v423, %v423
    %v488 = vpack.c.b16 %v424, %v424
    %v489 = vpack.c.b16 %v425, %v425
    %v490 = vpack.c.b16 %v426, %v426
    %v491 = vpack.c.b16 %v427, %v427
    %v492 = vpack.c.b16 %v428, %v428
    %v493 = vpack.c.b16 %v429, %v429
    %v494 = vpack.c.b16 %v430, %v430
    %v495 = vpack.c.b16 %v431, %v431
    %v496 = vpack.c.b16 %v432, %v432
    %v497 = vpack.c.b16 %v433, %v433
    %v498 = vpack.c.b16 %v434, %v434
    %v499 = vpack.c.b16 %v435, %v435
    %v500 = vpack.c.b16 %v436, %v436
    %v501 = vpack.c.b16 %v437, %v437
    %v502 = vpack.c.b16 %v438, %v438
    %v503 = vpack.c.b16 %v439, %v439
    %v504 = vpack.c.b16 %v440, %v440
    %v505 = vpack.c.b16 %v441, %v441
    %v506 = vpack.c.b16 %v442, %v442
    %v507 = vpack.c.b16 %v443, %v443
    %v508 = vpack.c.b16 %v444, %v444
    %v509 = vpack.c.b16 %v445, %v445
    %v510 = vpack.c.b16 %v446, %v446
    %v511 = vpack.c.b16 %v447, %v447
    %v512 = vpack.c.b16 %v448, %v448
    %v513 = vpack.c.b16 %v449, %v449
    %v514 = vpack.c.b16 %v450, %v450
    %v515 = vpack.c.b16 %v451, %v451
    %v516 = vpack.c.b16 %v452, %v452
    %v517 = vpack.c.b16 %v453, %v453
    %v518 = vpack.c.b16 %v454, %v454
    %v519 = vpack.c.b16 %v455, %v455
    %v520 = vpack.c.b16 %v456, %v456
    %v521 = vpack.c.b16 %v457, %v457
    %v522 = vpack.c.b16 %v458, %v458
    %v523 = vpack.c.b16 %v459, %v459
    %v524 = vpack.c.b16 %v460, %v460
    %v525 = vpack.c.b16 %v461, %v461
    %v526 = vpack.c.b16 %v462, %v462
    %v527 = vpack.c.b16 %v463, %v463
    %v528 = vpack.c.b16 %v464, %v464
    %v529 = vpack.c.b16 %v465, %v465
    %v530 = vpack.c.b16 %v466, %v466
    %v531 = vpack.c.b16 %v467, %v467
    %v532 = vpack.c.b16 %v468, %v468
    %v533 = vpack.c.b16 %v469, %v469
    %v534 = vpack.c.b16 %v470, %v470
    %v535 = vpack.c.b16 %v471, %v471
    %v536 = vpack.c.b16 %v472, %v472
    %v537 = vpack.c.b16 %v473, %v473
    %v538 = vpack.c.b16 %v474, %v474
    %v539 = vpack.c.b16 %v475, %v475
    %v540 = vpack.c.b16 %v476, %v476
    %605 = vst [vmem:[#allocation2] sm:$0xf] %v477
    %606 = vst [vmem:[#allocation2 + $0x4] sm:$0xf] %v478
    %607 = vst [vmem:[#allocation2 + $0x8] sm:$0xf] %v479
    %608 = vst [vmem:[#allocation2 + $0xc] sm:$0xf] %v480
    %609 = vst [vmem:[#allocation2 + $0x10] sm:$0xf] %v481
    %610 = vst [vmem:[#allocation2 + $0x14] sm:$0xf] %v482
    %611 = vst [vmem:[#allocation2 + $0x18] sm:$0xf] %v483
    %612 = vst [vmem:[#allocation2 + $0x1c] sm:$0xf] %v484
    %613 = vst [vmem:[#allocation2 + $0x20] sm:$0xf] %v485
    %614 = vst [vmem:[#allocation2 + $0x24] sm:$0xf] %v486
    %615 = vst [vmem:[#allocation2 + $0x28] sm:$0xf] %v487
    %616 = vst [vmem:[#allocation2 + $0x2c] sm:$0xf] %v488
    %617 = vst [vmem:[#allocation2 + $0x30] sm:$0xf] %v489
    %618 = vst [vmem:[#allocation2 + $0x34] sm:$0xf] %v490
    %619 = vst [vmem:[#allocation2 + $0x38] sm:$0xf] %v491
    %620 = vst [vmem:[#allocation2 + $0x3c] sm:$0xf] %v492
    %621 = vst [vmem:[#allocation2 + $0x40] sm:$0xf] %v493
    %622 = vst [vmem:[#allocation2 + $0x44] sm:$0xf] %v494
    %623 = vst [vmem:[#allocation2 + $0x48] sm:$0xf] %v495
    %624 = vst [vmem:[#allocation2 + $0x4c] sm:$0xf] %v496
    %625 = vst [vmem:[#allocation2 + $0x50] sm:$0xf] %v497
    %626 = vst [vmem:[#allocation2 + $0x54] sm:$0xf] %v498
    %627 = vst [vmem:[#allocation2 + $0x58] sm:$0xf] %v499
    %628 = vst [vmem:[#allocation2 + $0x5c] sm:$0xf] %v500
    %629 = vst [vmem:[#allocation2 + $0x60] sm:$0xf] %v501
    %630 = vst [vmem:[#allocation2 + $0x64] sm:$0xf] %v502
    %631 = vst [vmem:[#allocation2 + $0x68] sm:$0xf] %v503
    %632 = vst [vmem:[#allocation2 + $0x6c] sm:$0xf] %v504
    %633 = vst [vmem:[#allocation2 + $0x70] sm:$0xf] %v505
    %634 = vst [vmem:[#allocation2 + $0x74] sm:$0xf] %v506
    %635 = vst [vmem:[#allocation2 + $0x78] sm:$0xf] %v507
    %636 = vst [vmem:[#allocation2 + $0x7c] sm:$0xf] %v508
    %637 = vst [vmem:[#allocation2 + $0x80] sm:$0xf] %v509
    %638 = vst [vmem:[#allocation2 + $0x84] sm:$0xf] %v510
    %639 = vst [vmem:[#allocation2 + $0x88] sm:$0xf] %v511
    %640 = vst [vmem:[#allocation2 + $0x8c] sm:$0xf] %v512
    %641 = vst [vmem:[#allocation2 + $0x90] sm:$0xf] %v513
    %642 = vst [vmem:[#allocation2 + $0x94] sm:$0xf] %v514
    %643 = vst [vmem:[#allocation2 + $0x98] sm:$0xf] %v515
    %644 = vst [vmem:[#allocation2 + $0x9c] sm:$0xf] %v516
    %645 = vst [vmem:[#allocation2 + $0xa0] sm:$0xf] %v517
    %646 = vst [vmem:[#allocation2 + $0xa4] sm:$0xf] %v518
    %647 = vst [vmem:[#allocation2 + $0xa8] sm:$0xf] %v519
    %648 = vst [vmem:[#allocation2 + $0xac] sm:$0xf] %v520
    %649 = vst [vmem:[#allocation2 + $0xb0] sm:$0xf] %v521
    %650 = vst [vmem:[#allocation2 + $0xb4] sm:$0xf] %v522
    %651 = vst [vmem:[#allocation2 + $0xb8] sm:$0xf] %v523
    %652 = vst [vmem:[#allocation2 + $0xbc] sm:$0xf] %v524
    %653 = vst [vmem:[#allocation2 + $0xc0] sm:$0xf] %v525
    %654 = vst [vmem:[#allocation2 + $0xc4] sm:$0xf] %v526
    %655 = vst [vmem:[#allocation2 + $0xc8] sm:$0xf] %v527
    %656 = vst [vmem:[#allocation2 + $0xcc] sm:$0xf] %v528
    %657 = vst [vmem:[#allocation2 + $0xd0] sm:$0xf] %v529
    %658 = vst [vmem:[#allocation2 + $0xd4] sm:$0xf] %v530
    %659 = vst [vmem:[#allocation2 + $0xd8] sm:$0xf] %v531
    %660 = vst [vmem:[#allocation2 + $0xdc] sm:$0xf] %v532
    %661 = vst [vmem:[#allocation2 + $0xe0] sm:$0xf] %v533
    %662 = vst [vmem:[#allocation2 + $0xe4] sm:$0xf] %v534
    %663 = vst [vmem:[#allocation2 + $0xe8] sm:$0xf] %v535
    %664 = vst [vmem:[#allocation2 + $0xec] sm:$0xf] %v536
    %665 = vst [vmem:[#allocation2 + $0xf0] sm:$0xf] %v537
    %666 = vst [vmem:[#allocation2 + $0xf4] sm:$0xf] %v538
    %667 = vst [vmem:[#allocation2 + $0xf8] sm:$0xf] %v539
    %668 = vst [vmem:[#allocation2 + $0xfc] sm:$0xf] %v540
    // Predicated region
    $region14: #{conv_bn.3} parent=1 // pred_check
      _
    $region15: #{conv_bn.3} parent=1 // pred_check_branch
      %670 = sbr.rel (0) target = $region17
    $region16: #{conv_bn.3} parent=1 // pred_region
      %s672 = ssub.s32 4096, 4096
      %673 = vsyncadd [#allocation3], %s672
      %s674 = sshll.u32 [#allocation2], 4
      %s675 = int_to_ptr.vmem [resolvable:$true] %s674
      %680 = dma.vmem_to_hbm [thread:$0]  %s675, 4096, %s3, [#allocation3], 64, 64, 4
    $region17: #{conv_bn.3} parent=1 // pred_fallthru
      _
    // Predicated region
    $region18: #{conv_bn.3} parent=1 // pred_check
      _
    $region19: #{conv_bn.3} parent=1 // pred_check_branch
      %682 = sbr.rel (0) target = $region21
    $region20: #{conv_bn.3} parent=1 // pred_region
      %683 = dma.done [#allocation3], 4096
    $region21: #{conv_bn.3} parent=1 // pred_fallthru
      _
    %684 = vsyncpa [#allocation3], 1

// kernel: conv_bn.2
$region0: #{conv_bn.2}
  #allocation0 [shape = 'u32[]', space=smem, size = 0x4, offset = 0x4, fixed_abs, tag = 'smem constant byte address 0x4 - core index']
  #allocation1 [shape = 'u32[144,128]{1,0:T(1,128)}', space=vmem, size = 0x12000, scoped, tag = 'internal scratch']
  #allocation2 [shape = 'f32[512,128]{1,0:T(8,128)}', space=vmem, size = 0x40000, scoped, tag = 'scratch operand']
  %s0 = inlined_call_operand.vmem [shape: bf16[512,256], index: 0, kind: input, shape index: {}]
  %s1 = inlined_call_operand.vmem [shape: bf16[256,128], index: 1, kind: input, shape index: {}]
  %s2 = inlined_call_operand.vmem [shape: bf16[512,128], index: 2, kind: output, shape index: {0}]
  %s3 = inlined_call_operand.vmem [shape: f32[8,128], index: 3, kind: output, shape index: {1}]
  %4 = xla_tuple %s2, %s3
  %s5 = sld [smem:[#allocation0]]
  $region34: #{conv_bn.2} parent=0
    _
  %s7 = ssub.s32 1, %s5
  %s8 = scalar_select 0, %s7, %s5
  // Predicated region
  $region2: #{conv_bn.2} parent=0 // pred_check
    _
  $region3: #{conv_bn.2} parent=0 // pred_check_branch
    %10 = sbr.rel (0) target = $region5
  $region4: #{conv_bn.2} parent=0 // pred_region
    _
  $region5: #{conv_bn.2} parent=0 // pred_fallthru
    _
  // Predicated region
  $region6: #{conv_bn.2} parent=0 // pred_check
    _
  $region7: #{conv_bn.2} parent=0 // pred_check_branch
    %12 = sbr.rel (0) target = $region9
  $region8: #{conv_bn.2} parent=0 // pred_region
    _
  $region9: #{conv_bn.2} parent=0 // pred_fallthru
    _
  %p14 = scmp.eq.s32.totalorder 0, 0
  // Predicated region
  $region10: #{conv_bn.2} parent=0 // pred_check
    %p15 = pneg %p14
  $region11: #{conv_bn.2} parent=0 // pred_check_branch
    %17 = sbr.rel (%p15) target = $region13
  $region12: #{conv_bn.2} parent=0 // pred_region
    %18 = vst [vmem:[#allocation2] sm:$0xff] 0.0
    %19 = vst [vmem:[#allocation2 + $0x8] sm:$0xff] 0.0
    %20 = vst [vmem:[#allocation2 + $0x10] sm:$0xff] 0.0
    %21 = vst [vmem:[#allocation2 + $0x18] sm:$0xff] 0.0
    %22 = vst [vmem:[#allocation2 + $0x20] sm:$0xff] 0.0
    %23 = vst [vmem:[#allocation2 + $0x28] sm:$0xff] 0.0
    %24 = vst [vmem:[#allocation2 + $0x30] sm:$0xff] 0.0
    %25 = vst [vmem:[#allocation2 + $0x38] sm:$0xff] 0.0
    %26 = vst [vmem:[#allocation2 + $0x40] sm:$0xff] 0.0
    %27 = vst [vmem:[#allocation2 + $0x48] sm:$0xff] 0.0
    %28 = vst [vmem:[#allocation2 + $0x50] sm:$0xff] 0.0
    %29 = vst [vmem:[#allocation2 + $0x58] sm:$0xff] 0.0
    %30 = vst [vmem:[#allocation2 + $0x60] sm:$0xff] 0.0
    %31 = vst [vmem:[#allocation2 + $0x68] sm:$0xff] 0.0
    %32 = vst [vmem:[#allocation2 + $0x70] sm:$0xff] 0.0
    %33 = vst [vmem:[#allocation2 + $0x78] sm:$0xff] 0.0
    %34 = vst [vmem:[#allocation2 + $0x80] sm:$0xff] 0.0
    %35 = vst [vmem:[#allocation2 + $0x88] sm:$0xff] 0.0
    %36 = vst [vmem:[#allocation2 + $0x90] sm:$0xff] 0.0
    %37 = vst [vmem:[#allocation2 + $0x98] sm:$0xff] 0.0
    %38 = vst [vmem:[#allocation2 + $0xa0] sm:$0xff] 0.0
    %39 = vst [vmem:[#allocation2 + $0xa8] sm:$0xff] 0.0
    %40 = vst [vmem:[#allocation2 + $0xb0] sm:$0xff] 0.0
    %41 = vst [vmem:[#allocation2 + $0xb8] sm:$0xff] 0.0
    %42 = vst [vmem:[#allocation2 + $0xc0] sm:$0xff] 0.0
    %43 = vst [vmem:[#allocation2 + $0xc8] sm:$0xff] 0.0
    %44 = vst [vmem:[#allocation2 + $0xd0] sm:$0xff] 0.0
    %45 = vst [vmem:[#allocation2 + $0xd8] sm:$0xff] 0.0
    %46 = vst [vmem:[#allocation2 + $0xe0] sm:$0xff] 0.0
    %47 = vst [vmem:[#allocation2 + $0xe8] sm:$0xff] 0.0
    %48 = vst [vmem:[#allocation2 + $0xf0] sm:$0xff] 0.0
    %49 = vst [vmem:[#allocation2 + $0xf8] sm:$0xff] 0.0
    %50 = vst [vmem:[#allocation2 + $0x100] sm:$0xff] 0.0
    %51 = vst [vmem:[#allocation2 + $0x108] sm:$0xff] 0.0
    %52 = vst [vmem:[#allocation2 + $0x110] sm:$0xff] 0.0
    %53 = vst [vmem:[#allocation2 + $0x118] sm:$0xff] 0.0
    %54 = vst [vmem:[#allocation2 + $0x120] sm:$0xff] 0.0
    %55 = vst [vmem:[#allocation2 + $0x128] sm:$0xff] 0.0
    %56 = vst [vmem:[#allocation2 + $0x130] sm:$0xff] 0.0
    %57 = vst [vmem:[#allocation2 + $0x138] sm:$0xff] 0.0
    %58 = vst [vmem:[#allocation2 + $0x140] sm:$0xff] 0.0
    %59 = vst [vmem:[#allocation2 + $0x148] sm:$0xff] 0.0
    %60 = vst [vmem:[#allocation2 + $0x150] sm:$0xff] 0.0
    %61 = vst [vmem:[#allocation2 + $0x158] sm:$0xff] 0.0
    %62 = vst [vmem:[#allocation2 + $0x160] sm:$0xff] 0.0
    %63 = vst [vmem:[#allocation2 + $0x168] sm:$0xff] 0.0
    %64 = vst [vmem:[#allocation2 + $0x170] sm:$0xff] 0.0
    %65 = vst [vmem:[#allocation2 + $0x178] sm:$0xff] 0.0
    %66 = vst [vmem:[#allocation2 + $0x180] sm:$0xff] 0.0
    %67 = vst [vmem:[#allocation2 + $0x188] sm:$0xff] 0.0
    %68 = vst [vmem:[#allocation2 + $0x190] sm:$0xff] 0.0
    %69 = vst [vmem:[#allocation2 + $0x198] sm:$0xff] 0.0
    %70 = vst [vmem:[#allocation2 + $0x1a0] sm:$0xff] 0.0
    %71 = vst [vmem:[#allocation2 + $0x1a8] sm:$0xff] 0.0
    %72 = vst [vmem:[#allocation2 + $0x1b0] sm:$0xff] 0.0
    %73 = vst [vmem:[#allocation2 + $0x1b8] sm:$0xff] 0.0
    %74 = vst [vmem:[#allocation2 + $0x1c0] sm:$0xff] 0.0
    %75 = vst [vmem:[#allocation2 + $0x1c8] sm:$0xff] 0.0
    %76 = vst [vmem:[#allocation2 + $0x1d0] sm:$0xff] 0.0
    %77 = vst [vmem:[#allocation2 + $0x1d8] sm:$0xff] 0.0
    %78 = vst [vmem:[#allocation2 + $0x1e0] sm:$0xff] 0.0
    %79 = vst [vmem:[#allocation2 + $0x1e8] sm:$0xff] 0.0
    %80 = vst [vmem:[#allocation2 + $0x1f0] sm:$0xff] 0.0
    %81 = vst [vmem:[#allocation2 + $0x1f8] sm:$0xff] 0.0
    %82 = vst [vmem:[%s3] sm:$0xff] 0.0
  $region13: #{conv_bn.2} parent=0 // pred_fallthru
    _
  %v83 = vld [vmem:[#allocation2] sm:$0xff]
  %v84 = vld [vmem:[#allocation2 + $0x8] sm:$0xff]
  %v85 = vld [vmem:[#allocation2 + $0x10] sm:$0xff]
  %v86 = vld [vmem:[#allocation2 + $0x18] sm:$0xff]
  %v87 = vld [vmem:[#allocation2 + $0x20] sm:$0xff]
  %v88 = vld [vmem:[#allocation2 + $0x28] sm:$0xff]
  %v89 = vld [vmem:[#allocation2 + $0x30] sm:$0xff]
  %v90 = vld [vmem:[#allocation2 + $0x38] sm:$0xff]
  %v91 = vld [vmem:[#allocation2 + $0x40] sm:$0xff]
  %v92 = vld [vmem:[#allocation2 + $0x48] sm:$0xff]
  %v93 = vld [vmem:[#allocation2 + $0x50] sm:$0xff]
  %v94 = vld [vmem:[#allocation2 + $0x58] sm:$0xff]
  %v95 = vld [vmem:[#allocation2 + $0x60] sm:$0xff]
  %v96 = vld [vmem:[#allocation2 + $0x68] sm:$0xff]
  %v97 = vld [vmem:[#allocation2 + $0x70] sm:$0xff]
  %v98 = vld [vmem:[#allocation2 + $0x78] sm:$0xff]
  %v99 = vld [vmem:[#allocation2 + $0x80] sm:$0xff]
  %v100 = vld [vmem:[#allocation2 + $0x88] sm:$0xff]
  %v101 = vld [vmem:[#allocation2 + $0x90] sm:$0xff]
  %v102 = vld [vmem:[#allocation2 + $0x98] sm:$0xff]
  %v103 = vld [vmem:[#allocation2 + $0xa0] sm:$0xff]
  %v104 = vld [vmem:[#allocation2 + $0xa8] sm:$0xff]
  %v105 = vld [vmem:[#allocation2 + $0xb0] sm:$0xff]
  %v106 = vld [vmem:[#allocation2 + $0xb8] sm:$0xff]
  %v107 = vld [vmem:[#allocation2 + $0xc0] sm:$0xff]
  %v108 = vld [vmem:[#allocation2 + $0xc8] sm:$0xff]
  %v109 = vld [vmem:[#allocation2 + $0xd0] sm:$0xff]
  %v110 = vld [vmem:[#allocation2 + $0xd8] sm:$0xff]
  %v111 = vld [vmem:[#allocation2 + $0xe0] sm:$0xff]
  %v112 = vld [vmem:[#allocation2 + $0xe8] sm:$0xff]
  %v113 = vld [vmem:[#allocation2 + $0xf0] sm:$0xff]
  %v114 = vld [vmem:[#allocation2 + $0xf8] sm:$0xff]
  %v115 = vld [vmem:[#allocation2 + $0x100] sm:$0xff]
  %v116 = vld [vmem:[#allocation2 + $0x108] sm:$0xff]
  %v117 = vld [vmem:[#allocation2 + $0x110] sm:$0xff]
  %v118 = vld [vmem:[#allocation2 + $0x118] sm:$0xff]
  %v119 = vld [vmem:[#allocation2 + $0x120] sm:$0xff]
  %v120 = vld [vmem:[#allocation2 + $0x128] sm:$0xff]
  %v121 = vld [vmem:[#allocation2 + $0x130] sm:$0xff]
  %v122 = vld [vmem:[#allocation2 + $0x138] sm:$0xff]
  %v123 = vld [vmem:[#allocation2 + $0x140] sm:$0xff]
  %v124 = vld [vmem:[#allocation2 + $0x148] sm:$0xff]
  %v125 = vld [vmem:[#allocation2 + $0x150] sm:$0xff]
  %v126 = vld [vmem:[#allocation2 + $0x158] sm:$0xff]
  %v127 = vld [vmem:[#allocation2 + $0x160] sm:$0xff]
  %v128 = vld [vmem:[#allocation2 + $0x168] sm:$0xff]
  %v129 = vld [vmem:[#allocation2 + $0x170] sm:$0xff]
  %v130 = vld [vmem:[#allocation2 + $0x178] sm:$0xff]
  %v131 = vld [vmem:[#allocation2 + $0x180] sm:$0xff]
  %v132 = vld [vmem:[#allocation2 + $0x188] sm:$0xff]
  %v133 = vld [vmem:[#allocation2 + $0x190] sm:$0xff]
  %v134 = vld [vmem:[#allocation2 + $0x198] sm:$0xff]
  %v135 = vld [vmem:[#allocation2 + $0x1a0] sm:$0xff]
  %v136 = vld [vmem:[#allocation2 + $0x1a8] sm:$0xff]
  %v137 = vld [vmem:[#allocation2 + $0x1b0] sm:$0xff]
  %v138 = vld [vmem:[#allocation2 + $0x1b8] sm:$0xff]
  %v139 = vld [vmem:[#allocation2 + $0x1c0] sm:$0xff]
  %v140 = vld [vmem:[#allocation2 + $0x1c8] sm:$0xff]
  %v141 = vld [vmem:[#allocation2 + $0x1d0] sm:$0xff]
  %v142 = vld [vmem:[#allocation2 + $0x1d8] sm:$0xff]
  %v143 = vld [vmem:[#allocation2 + $0x1e0] sm:$0xff]
  %v144 = vld [vmem:[#allocation2 + $0x1e8] sm:$0xff]
  %v145 = vld [vmem:[#allocation2 + $0x1f0] sm:$0xff]
  %v146 = vld [vmem:[#allocation2 + $0x1f8] sm:$0xff]
  %v147 = vld [vmem:[%s0] sm:$0xff]
  %v148 = vld [vmem:[%s0 + $0x8] sm:$0xff]
  %v149 = vld [vmem:[%s0 + $0x10] sm:$0xff]
  %v150 = vld [vmem:[%s0 + $0x18] sm:$0xff]
  %v151 = vld [vmem:[%s0 + $0x20] sm:$0xff]
  %v152 = vld [vmem:[%s0 + $0x28] sm:$0xff]
  %v153 = vld [vmem:[%s0 + $0x30] sm:$0xff]
  %v154 = vld [vmem:[%s0 + $0x38] sm:$0xff]
  %v155 = vld [vmem:[%s0 + $0x40] sm:$0xff]
  %v156 = vld [vmem:[%s0 + $0x48] sm:$0xff]
  %v157 = vld [vmem:[%s0 + $0x50] sm:$0xff]
  %v158 = vld [vmem:[%s0 + $0x58] sm:$0xff]
  %v159 = vld [vmem:[%s0 + $0x60] sm:$0xff]
  %v160 = vld [vmem:[%s0 + $0x68] sm:$0xff]
  %v161 = vld [vmem:[%s0 + $0x70] sm:$0xff]
  %v162 = vld [vmem:[%s0 + $0x78] sm:$0xff]
  %v163 = vld [vmem:[%s0 + $0x80] sm:$0xff]
  %v164 = vld [vmem:[%s0 + $0x88] sm:$0xff]
  %v165 = vld [vmem:[%s0 + $0x90] sm:$0xff]
  %v166 = vld [vmem:[%s0 + $0x98] sm:$0xff]
  %v167 = vld [vmem:[%s0 + $0xa0] sm:$0xff]
  %v168 = vld [vmem:[%s0 + $0xa8] sm:$0xff]
  %v169 = vld [vmem:[%s0 + $0xb0] sm:$0xff]
  %v170 = vld [vmem:[%s0 + $0xb8] sm:$0xff]
  %v171 = vld [vmem:[%s0 + $0xc0] sm:$0xff]
  %v172 = vld [vmem:[%s0 + $0xc8] sm:$0xff]
  %v173 = vld [vmem:[%s0 + $0xd0] sm:$0xff]
  %v174 = vld [vmem:[%s0 + $0xd8] sm:$0xff]
  %v175 = vld [vmem:[%s0 + $0xe0] sm:$0xff]
  %v176 = vld [vmem:[%s0 + $0xe8] sm:$0xff]
  %v177 = vld [vmem:[%s0 + $0xf0] sm:$0xff]
  %v178 = vld [vmem:[%s0 + $0xf8] sm:$0xff]
  %v179 = vld [vmem:[%s0 + $0x100] sm:$0xff]
  %v180 = vld [vmem:[%s0 + $0x108] sm:$0xff]
  %v181 = vld [vmem:[%s0 + $0x110] sm:$0xff]
  %v182 = vld [vmem:[%s0 + $0x118] sm:$0xff]
  %v183 = vld [vmem:[%s0 + $0x120] sm:$0xff]
  %v184 = vld [vmem:[%s0 + $0x128] sm:$0xff]
  %v185 = vld [vmem:[%s0 + $0x130] sm:$0xff]
  %v186 = vld [vmem:[%s0 + $0x138] sm:$0xff]
  %v187 = vld [vmem:[%s0 + $0x140] sm:$0xff]
  %v188 = vld [vmem:[%s0 + $0x148] sm:$0xff]
  %v189 = vld [vmem:[%s0 + $0x150] sm:$0xff]
  %v190 = vld [vmem:[%s0 + $0x158] sm:$0xff]
  %v191 = vld [vmem:[%s0 + $0x160] sm:$0xff]
  %v192 = vld [vmem:[%s0 + $0x168] sm:$0xff]
  %v193 = vld [vmem:[%s0 + $0x170] sm:$0xff]
  %v194 = vld [vmem:[%s0 + $0x178] sm:$0xff]
  %v195 = vld [vmem:[%s0 + $0x180] sm:$0xff]
  %v196 = vld [vmem:[%s0 + $0x188] sm:$0xff]
  %v197 = vld [vmem:[%s0 + $0x190] sm:$0xff]
  %v198 = vld [vmem:[%s0 + $0x198] sm:$0xff]
  %v199 = vld [vmem:[%s0 + $0x1a0] sm:$0xff]
  %v200 = vld [vmem:[%s0 + $0x1a8] sm:$0xff]
  %v201 = vld [vmem:[%s0 + $0x1b0] sm:$0xff]
  %v202 = vld [vmem:[%s0 + $0x1b8] sm:$0xff]
  %v203 = vld [vmem:[%s0 + $0x1c0] sm:$0xff]
  %v204 = vld [vmem:[%s0 + $0x1c8] sm:$0xff]
  %v205 = vld [vmem:[%s0 + $0x1d0] sm:$0xff]
  %v206 = vld [vmem:[%s0 + $0x1d8] sm:$0xff]
  %v207 = vld [vmem:[%s0 + $0x1e0] sm:$0xff]
  %v208 = vld [vmem:[%s0 + $0x1e8] sm:$0xff]
  %v209 = vld [vmem:[%s0 + $0x1f0] sm:$0xff]
  %v210 = vld [vmem:[%s0 + $0x1f8] sm:$0xff]
  %v211 = vld [vmem:[%s1] sm:$0xf]
  %v212 = vld [vmem:[%s1 + $0x4] sm:$0xf]
  %v213 = vld [vmem:[%s1 + $0x8] sm:$0xf]
  %v214 = vld [vmem:[%s1 + $0xc] sm:$0xf]
  %v215 = vld [vmem:[%s1 + $0x10] sm:$0xf]
  %v216 = vld [vmem:[%s1 + $0x14] sm:$0xf]
  %v217 = vld [vmem:[%s1 + $0x18] sm:$0xf]
  %v218 = vld [vmem:[%s1 + $0x1c] sm:$0xf]
  %v219 = vld [vmem:[%s1 + $0x20] sm:$0xf]
  %v220 = vld [vmem:[%s1 + $0x24] sm:$0xf]
  %v221 = vld [vmem:[%s1 + $0x28] sm:$0xf]
  %v222 = vld [vmem:[%s1 + $0x2c] sm:$0xf]
  %v223 = vld [vmem:[%s1 + $0x30] sm:$0xf]
  %v224 = vld [vmem:[%s1 + $0x34] sm:$0xf]
  %v225 = vld [vmem:[%s1 + $0x38] sm:$0xf]
  %v226 = vld [vmem:[%s1 + $0x3c] sm:$0xf]
  %v227 = vld [vmem:[%s1 + $0x40] sm:$0xf]
  %v228 = vld [vmem:[%s1 + $0x44] sm:$0xf]
  %v229 = vld [vmem:[%s1 + $0x48] sm:$0xf]
  %v230 = vld [vmem:[%s1 + $0x4c] sm:$0xf]
  %v231 = vld [vmem:[%s1 + $0x50] sm:$0xf]
  %v232 = vld [vmem:[%s1 + $0x54] sm:$0xf]
  %v233 = vld [vmem:[%s1 + $0x58] sm:$0xf]
  %v234 = vld [vmem:[%s1 + $0x5c] sm:$0xf]
  %v235 = vld [vmem:[%s1 + $0x60] sm:$0xf]
  %v236 = vld [vmem:[%s1 + $0x64] sm:$0xf]
  %v237 = vld [vmem:[%s1 + $0x68] sm:$0xf]
  %v238 = vld [vmem:[%s1 + $0x6c] sm:$0xf]
  %v239 = vld [vmem:[%s1 + $0x70] sm:$0xf]
  %v240 = vld [vmem:[%s1 + $0x74] sm:$0xf]
  %v241 = vld [vmem:[%s1 + $0x78] sm:$0xf]
  %v242 = vld [vmem:[%s1 + $0x7c] sm:$0xf]
  %v307 = vunpack.c.l.b16 %v147
  %v308 = vunpack.c.h.b16 %v147
  %v309 = vunpack.c.l.b16 %v148
  %v310 = vunpack.c.h.b16 %v148
  %v311 = vunpack.c.l.b16 %v149
  %v312 = vunpack.c.h.b16 %v149
  %v313 = vunpack.c.l.b16 %v150
  %v314 = vunpack.c.h.b16 %v150
  %v315 = vunpack.c.l.b16 %v151
  %v316 = vunpack.c.h.b16 %v151
  %v317 = vunpack.c.l.b16 %v152
  %v318 = vunpack.c.h.b16 %v152
  %v319 = vunpack.c.l.b16 %v153
  %v320 = vunpack.c.h.b16 %v153
  %v321 = vunpack.c.l.b16 %v154
  %v322 = vunpack.c.h.b16 %v154
  %v323 = vunpack.c.l.b16 %v155
  %v324 = vunpack.c.h.b16 %v155
  %v325 = vunpack.c.l.b16 %v156
  %v326 = vunpack.c.h.b16 %v156
  %v327 = vunpack.c.l.b16 %v157
  %v328 = vunpack.c.h.b16 %v157
  %v329 = vunpack.c.l.b16 %v158
  %v330 = vunpack.c.h.b16 %v158
  %v331 = vunpack.c.l.b16 %v159
  %v332 = vunpack.c.h.b16 %v159
  %v333 = vunpack.c.l.b16 %v160
  %v334 = vunpack.c.h.b16 %v160
  %v335 = vunpack.c.l.b16 %v161
  %v336 = vunpack.c.h.b16 %v161
  %v337 = vunpack.c.l.b16 %v162
  %v338 = vunpack.c.h.b16 %v162
  %v339 = vunpack.c.l.b16 %v163
  %v340 = vunpack.c.h.b16 %v163
  %v341 = vunpack.c.l.b16 %v164
  %v342 = vunpack.c.h.b16 %v164
  %v343 = vunpack.c.l.b16 %v165
  %v344 = vunpack.c.h.b16 %v165
  %v345 = vunpack.c.l.b16 %v166
  %v346 = vunpack.c.h.b16 %v166
  %v347 = vunpack.c.l.b16 %v167
  %v348 = vunpack.c.h.b16 %v167
  %v349 = vunpack.c.l.b16 %v168
  %v350 = vunpack.c.h.b16 %v168
  %v351 = vunpack.c.l.b16 %v169
  %v352 = vunpack.c.h.b16 %v169
  %v353 = vunpack.c.l.b16 %v170
  %v354 = vunpack.c.h.b16 %v170
  %v355 = vunpack.c.l.b16 %v171
  %v356 = vunpack.c.h.b16 %v171
  %v357 = vunpack.c.l.b16 %v172
  %v358 = vunpack.c.h.b16 %v172
  %v359 = vunpack.c.l.b16 %v173
  %v360 = vunpack.c.h.b16 %v173
  %v361 = vunpack.c.l.b16 %v174
  %v362 = vunpack.c.h.b16 %v174
  %v363 = vunpack.c.l.b16 %v175
  %v364 = vunpack.c.h.b16 %v175
  %v365 = vunpack.c.l.b16 %v176
  %v366 = vunpack.c.h.b16 %v176
  %v367 = vunpack.c.l.b16 %v177
  %v368 = vunpack.c.h.b16 %v177
  %v369 = vunpack.c.l.b16 %v178
  %v370 = vunpack.c.h.b16 %v178
  %v371 = vunpack.c.l.b16 %v179
  %v372 = vunpack.c.h.b16 %v179
  %v373 = vunpack.c.l.b16 %v180
  %v374 = vunpack.c.h.b16 %v180
  %v375 = vunpack.c.l.b16 %v181
  %v376 = vunpack.c.h.b16 %v181
  %v377 = vunpack.c.l.b16 %v182
  %v378 = vunpack.c.h.b16 %v182
  %v379 = vunpack.c.l.b16 %v183
  %v380 = vunpack.c.h.b16 %v183
  %v381 = vunpack.c.l.b16 %v184
  %v382 = vunpack.c.h.b16 %v184
  %v383 = vunpack.c.l.b16 %v185
  %v384 = vunpack.c.h.b16 %v185
  %v385 = vunpack.c.l.b16 %v186
  %v386 = vunpack.c.h.b16 %v186
  %v387 = vunpack.c.l.b16 %v187
  %v388 = vunpack.c.h.b16 %v187
  %v389 = vunpack.c.l.b16 %v188
  %v390 = vunpack.c.h.b16 %v188
  %v391 = vunpack.c.l.b16 %v189
  %v392 = vunpack.c.h.b16 %v189
  %v393 = vunpack.c.l.b16 %v190
  %v394 = vunpack.c.h.b16 %v190
  %v395 = vunpack.c.l.b16 %v191
  %v396 = vunpack.c.h.b16 %v191
  %v397 = vunpack.c.l.b16 %v192
  %v398 = vunpack.c.h.b16 %v192
  %v399 = vunpack.c.l.b16 %v193
  %v400 = vunpack.c.h.b16 %v193
  %v401 = vunpack.c.l.b16 %v194
  %v402 = vunpack.c.h.b16 %v194
  %v403 = vunpack.c.l.b16 %v195
  %v404 = vunpack.c.h.b16 %v195
  %v405 = vunpack.c.l.b16 %v196
  %v406 = vunpack.c.h.b16 %v196
  %v407 = vunpack.c.l.b16 %v197
  %v408 = vunpack.c.h.b16 %v197
  %v409 = vunpack.c.l.b16 %v198
  %v410 = vunpack.c.h.b16 %v198
  %v411 = vunpack.c.l.b16 %v199
  %v412 = vunpack.c.h.b16 %v199
  %v413 = vunpack.c.l.b16 %v200
  %v414 = vunpack.c.h.b16 %v200
  %v415 = vunpack.c.l.b16 %v201
  %v416 = vunpack.c.h.b16 %v201
  %v417 = vunpack.c.l.b16 %v202
  %v418 = vunpack.c.h.b16 %v202
  %v419 = vunpack.c.l.b16 %v203
  %v420 = vunpack.c.h.b16 %v203
  %v421 = vunpack.c.l.b16 %v204
  %v422 = vunpack.c.h.b16 %v204
  %v423 = vunpack.c.l.b16 %v205
  %v424 = vunpack.c.h.b16 %v205
  %v425 = vunpack.c.l.b16 %v206
  %v426 = vunpack.c.h.b16 %v206
  %v427 = vunpack.c.l.b16 %v207
  %v428 = vunpack.c.h.b16 %v207
  %v429 = vunpack.c.l.b16 %v208
  %v430 = vunpack.c.h.b16 %v208
  %v431 = vunpack.c.l.b16 %v209
  %v432 = vunpack.c.h.b16 %v209
  %v433 = vunpack.c.l.b16 %v210
  %v434 = vunpack.c.h.b16 %v210
  %v435 = vpack.c.b16 %v309, %v307
  %v436 = vpack.c.b16 %v310, %v308
  %v437 = vpack.c.b16 %v313, %v311
  %v438 = vpack.c.b16 %v314, %v312
  %v439 = vpack.c.b16 %v317, %v315
  %v440 = vpack.c.b16 %v318, %v316
  %v441 = vpack.c.b16 %v321, %v319
  %v442 = vpack.c.b16 %v322, %v320
  %v443 = vpack.c.b16 %v325, %v323
  %v444 = vpack.c.b16 %v326, %v324
  %v445 = vpack.c.b16 %v329, %v327
  %v446 = vpack.c.b16 %v330, %v328
  %v447 = vpack.c.b16 %v333, %v331
  %v448 = vpack.c.b16 %v334, %v332
  %v449 = vpack.c.b16 %v337, %v335
  %v450 = vpack.c.b16 %v338, %v336
  %v451 = vpack.c.b16 %v341, %v339
  %v452 = vpack.c.b16 %v342, %v340
  %v453 = vpack.c.b16 %v345, %v343
  %v454 = vpack.c.b16 %v346, %v344
  %v455 = vpack.c.b16 %v349, %v347
  %v456 = vpack.c.b16 %v350, %v348
  %v457 = vpack.c.b16 %v353, %v351
  %v458 = vpack.c.b16 %v354, %v352
  %v459 = vpack.c.b16 %v357, %v355
  %v460 = vpack.c.b16 %v358, %v356
  %v461 = vpack.c.b16 %v361, %v359
  %v462 = vpack.c.b16 %v362, %v360
  %v463 = vpack.c.b16 %v365, %v363
  %v464 = vpack.c.b16 %v366, %v364
  %v465 = vpack.c.b16 %v369, %v367
  %v466 = vpack.c.b16 %v370, %v368
  %v467 = vpack.c.b16 %v373, %v371
  %v468 = vpack.c.b16 %v374, %v372
  %v469 = vpack.c.b16 %v377, %v375
  %v470 = vpack.c.b16 %v378, %v376
  %v471 = vpack.c.b16 %v381, %v379
  %v472 = vpack.c.b16 %v382, %v380
  %v473 = vpack.c.b16 %v385, %v383
  %v474 = vpack.c.b16 %v386, %v384
  %v475 = vpack.c.b16 %v389, %v387
  %v476 = vpack.c.b16 %v390, %v388
  %v477 = vpack.c.b16 %v393, %v391
  %v478 = vpack.c.b16 %v394, %v392
  %v479 = vpack.c.b16 %v397, %v395
  %v480 = vpack.c.b16 %v398, %v396
  %v481 = vpack.c.b16 %v401, %v399
  %v482 = vpack.c.b16 %v402, %v400
  %v483 = vpack.c.b16 %v405, %v403
  %v484 = vpack.c.b16 %v406, %v404
  %v485 = vpack.c.b16 %v409, %v407
  %v486 = vpack.c.b16 %v410, %v408
  %v487 = vpack.c.b16 %v413, %v411
  %v488 = vpack.c.b16 %v414, %v412
  %v489 = vpack.c.b16 %v417, %v415
  %v490 = vpack.c.b16 %v418, %v416
  %v491 = vpack.c.b16 %v421, %v419
  %v492 = vpack.c.b16 %v422, %v420
  %v493 = vpack.c.b16 %v425, %v423
  %v494 = vpack.c.b16 %v426, %v424
  %v495 = vpack.c.b16 %v429, %v427
  %v496 = vpack.c.b16 %v430, %v428
  %v497 = vpack.c.b16 %v433, %v431
  %v498 = vpack.c.b16 %v434, %v432
  %v595 = vunpack.c.l.b16 %v211
  %v596 = vunpack.c.l.b16 %v212
  %v597 = vunpack.c.l.b16 %v213
  %v598 = vunpack.c.l.b16 %v214
  %v599 = vunpack.c.l.b16 %v215
  %v600 = vunpack.c.l.b16 %v216
  %v601 = vunpack.c.l.b16 %v217
  %v602 = vunpack.c.l.b16 %v218
  %v603 = vunpack.c.l.b16 %v219
  %v604 = vunpack.c.l.b16 %v220
  %v605 = vunpack.c.l.b16 %v221
  %v606 = vunpack.c.l.b16 %v222
  %v607 = vunpack.c.l.b16 %v223
  %v608 = vunpack.c.l.b16 %v224
  %v609 = vunpack.c.l.b16 %v225
  %v610 = vunpack.c.l.b16 %v226
  %v611 = vunpack.c.l.b16 %v227
  %v612 = vunpack.c.l.b16 %v228
  %v613 = vunpack.c.l.b16 %v229
  %v614 = vunpack.c.l.b16 %v230
  %v615 = vunpack.c.l.b16 %v231
  %v616 = vunpack.c.l.b16 %v232
  %v617 = vunpack.c.l.b16 %v233
  %v618 = vunpack.c.l.b16 %v234
  %v619 = vunpack.c.l.b16 %v235
  %v620 = vunpack.c.l.b16 %v236
  %v621 = vunpack.c.l.b16 %v237
  %v622 = vunpack.c.l.b16 %v238
  %v623 = vunpack.c.l.b16 %v239
  %v624 = vunpack.c.l.b16 %v240
  %v625 = vunpack.c.l.b16 %v241
  %v626 = vunpack.c.l.b16 %v242
  %v627 = vpack.c.b16 %v596, %v595
  %v628 = vpack.c.b16 %v598, %v597
  %v629 = vpack.c.b16 %v600, %v599
  %v630 = vpack.c.b16 %v602, %v601
  %v631 = vpack.c.b16 %v604, %v603
  %v632 = vpack.c.b16 %v606, %v605
  %v633 = vpack.c.b16 %v608, %v607
  %v634 = vpack.c.b16 %v610, %v609
  %v635 = vpack.c.b16 %v612, %v611
  %v636 = vpack.c.b16 %v614, %v613
  %v637 = vpack.c.b16 %v616, %v615
  %v638 = vpack.c.b16 %v618, %v617
  %v639 = vpack.c.b16 %v620, %v619
  %v640 = vpack.c.b16 %v622, %v621
  %v641 = vpack.c.b16 %v624, %v623
  %v642 = vpack.c.b16 %v626, %v625
  %659 = vmatprep.subr.bf16.mxu0 0
  %660 = vmatpush1.bf16.msra.mxu0 %v634
  %661 = vmatprep.subr.bf16.mxu0 0
  %662 = vmatpush1.bf16.msra.mxu0 %v633
  %663 = vmatprep.subr.bf16.mxu0 0
  %664 = vmatpush1.bf16.msra.mxu0 %v632
  %665 = vmatprep.subr.bf16.mxu0 0
  %666 = vmatpush1.bf16.msra.mxu0 %v631
  %667 = vmatprep.subr.bf16.mxu0 0
  %668 = vmatpush1.bf16.msra.mxu0 %v630
  %669 = vmatprep.subr.bf16.mxu0 0
  %670 = vmatpush1.bf16.msra.mxu0 %v629
  %671 = vmatprep.subr.bf16.mxu0 0
  %672 = vmatpush1.bf16.msra.mxu0 %v628
  %673 = vmatprep.subr.bf16.mxu0 0
  %674 = vmatpush1.bf16.msra.mxu0 %v627
  %675 = vmatprep.subr.bf16.mxu0 0
  %676 = vmatpush2.bf16.msra.mxu0 %v642
  %677 = vmatprep.subr.bf16.mxu0 0
  %678 = vmatpush2.bf16.msra.mxu0 %v641
  %679 = vmatprep.subr.bf16.mxu0 0
  %680 = vmatpush2.bf16.msra.mxu0 %v640
  %681 = vmatprep.subr.bf16.mxu0 0
  %682 = vmatpush2.bf16.msra.mxu0 %v639
  %683 = vmatprep.subr.bf16.mxu0 0
  %684 = vmatpush2.bf16.msra.mxu0 %v638
  %685 = vmatprep.subr.bf16.mxu0 0
  %686 = vmatpush2.bf16.msra.mxu0 %v637
  %687 = vmatprep.subr.bf16.mxu0 0
  %688 = vmatpush2.bf16.msra.mxu0 %v636
  %689 = vmatprep.subr.bf16.mxu0 0
  %690 = vmatpush2.bf16.msra.mxu0 %v635
  %691 = vmatprep.mubr.bf16.mxu0 %v436
  %692 = vmatmul.mubr.bf16.gmra.mxu0 %v435
  %v693 = vpop.f32.mrf.mxu0
  %v694 = vadd.f32 0.0, %v693
  %v695 = vpop.f32.mrf.mxu0
  %v696 = vpop.f32.mrf.mxu0
  %v697 = vadd.f32 0.0, %v696
  %v698 = vpop.f32.mrf.mxu0
  %699 = vmatprep.mubr.bf16.mxu0 %v438
  %700 = vmatmul.mubr.bf16.gmra.mxu0 %v437
  %v701 = vpop.f32.mrf.mxu0
  %v702 = vadd.f32 0.0, %v701
  %v703 = vpop.f32.mrf.mxu0
  %v704 = vpop.f32.mrf.mxu0
  %v705 = vadd.f32 0.0, %v704
  %v706 = vpop.f32.mrf.mxu0
  %707 = vmatprep.mubr.bf16.mxu0 %v440
  %708 = vmatmul.mubr.bf16.gmra.mxu0 %v439
  %v709 = vpop.f32.mrf.mxu0
  %v710 = vadd.f32 0.0, %v709
  %v711 = vpop.f32.mrf.mxu0
  %v712 = vpop.f32.mrf.mxu0
  %v713 = vadd.f32 0.0, %v712
  %v714 = vpop.f32.mrf.mxu0
  %715 = vmatprep.mubr.bf16.mxu0 %v442
  %716 = vmatmul.mubr.bf16.gmra.mxu0 %v441
  %v717 = vpop.f32.mrf.mxu0
  %v718 = vadd.f32 0.0, %v717
  %v719 = vpop.f32.mrf.mxu0
  %v720 = vpop.f32.mrf.mxu0
  %v721 = vadd.f32 0.0, %v720
  %v722 = vpop.f32.mrf.mxu0
  %723 = vmatprep.mubr.bf16.mxu0 %v444
  %724 = vmatmul.mubr.bf16.gmra.mxu0 %v443
  %v725 = vpop.f32.mrf.mxu0
  %v726 = vadd.f32 0.0, %v725
  %v727 = vpop.f32.mrf.mxu0
  %v728 = vpop.f32.mrf.mxu0
  %v729 = vadd.f32 0.0, %v728
  %v730 = vpop.f32.mrf.mxu0
  %731 = vmatprep.mubr.bf16.mxu0 %v446
  %732 = vmatmul.mubr.bf16.gmra.mxu0 %v445
  %v733 = vpop.f32.mrf.mxu0
  %v734 = vadd.f32 0.0, %v733
  %v735 = vpop.f32.mrf.mxu0
  %v736 = vpop.f32.mrf.mxu0
  %v737 = vadd.f32 0.0, %v736
  %v738 = vpop.f32.mrf.mxu0
  %739 = vmatprep.mubr.bf16.mxu0 %v448
  %740 = vmatmul.mubr.bf16.gmra.mxu0 %v447
  %v741 = vpop.f32.mrf.mxu0
  %v742 = vadd.f32 0.0, %v741
  %v743 = vpop.f32.mrf.mxu0
  %v744 = vpop.f32.mrf.mxu0
  %v745 = vadd.f32 0.0, %v744
  %v746 = vpop.f32.mrf.mxu0
  %747 = vmatprep.mubr.bf16.mxu0 %v450
  %748 = vmatmul.mubr.bf16.gmra.mxu0 %v449
  %v749 = vpop.f32.mrf.mxu0
  %v750 = vadd.f32 0.0, %v749
  %v751 = vpop.f32.mrf.mxu0
  %v752 = vpop.f32.mrf.mxu0
  %v753 = vadd.f32 0.0, %v752
  %v754 = vpop.f32.mrf.mxu0
  %755 = vmatprep.mubr.bf16.mxu0 %v452
  %756 = vmatmul.mubr.bf16.gmra.mxu0 %v451
  %v757 = vpop.f32.mrf.mxu0
  %v758 = vadd.f32 0.0, %v757
  %v759 = vpop.f32.mrf.mxu0
  %v760 = vpop.f32.mrf.mxu0
  %v761 = vadd.f32 0.0, %v760
  %v762 = vpop.f32.mrf.mxu0
  %763 = vmatprep.mubr.bf16.mxu0 %v454
  %764 = vmatmul.mubr.bf16.gmra.mxu0 %v453
  %v765 = vpop.f32.mrf.mxu0
  %v766 = vadd.f32 0.0, %v765
  %v767 = vpop.f32.mrf.mxu0
  %v768 = vpop.f32.mrf.mxu0
  %v769 = vadd.f32 0.0, %v768
  %v770 = vpop.f32.mrf.mxu0
  %771 = vmatprep.mubr.bf16.mxu0 %v456
  %772 = vmatmul.mubr.bf16.gmra.mxu0 %v455
  %v773 = vpop.f32.mrf.mxu0
  %v774 = vadd.f32 0.0, %v773
  %v775 = vpop.f32.mrf.mxu0
  %v776 = vpop.f32.mrf.mxu0
  %v777 = vadd.f32 0.0, %v776
  %v778 = vpop.f32.mrf.mxu0
  %779 = vmatprep.mubr.bf16.mxu0 %v458
  %780 = vmatmul.mubr.bf16.gmra.mxu0 %v457
  %v781 = vpop.f32.mrf.mxu0
  %v782 = vadd.f32 0.0, %v781
  %v783 = vpop.f32.mrf.mxu0
  %v784 = vpop.f32.mrf.mxu0
  %v785 = vadd.f32 0.0, %v784
  %v786 = vpop.f32.mrf.mxu0
  %787 = vmatprep.mubr.bf16.mxu0 %v460
  %788 = vmatmul.mubr.bf16.gmra.mxu0 %v459
  %v789 = vpop.f32.mrf.mxu0
  %v790 = vadd.f32 0.0, %v789
  %v791 = vpop.f32.mrf.mxu0
  %v792 = vpop.f32.mrf.mxu0
  %v793 = vadd.f32 0.0, %v792
  %v794 = vpop.f32.mrf.mxu0
  %795 = vmatprep.mubr.bf16.mxu0 %v462
  %796 = vmatmul.mubr.bf16.gmra.mxu0 %v461
  %v797 = vpop.f32.mrf.mxu0
  %v798 = vadd.f32 0.0, %v797
  %v799 = vpop.f32.mrf.mxu0
  %v800 = vpop.f32.mrf.mxu0
  %v801 = vadd.f32 0.0, %v800
  %v802 = vpop.f32.mrf.mxu0
  %803 = vmatprep.mubr.bf16.mxu0 %v464
  %804 = vmatmul.mubr.bf16.gmra.mxu0 %v463
  %v805 = vpop.f32.mrf.mxu0
  %v806 = vadd.f32 0.0, %v805
  %v807 = vpop.f32.mrf.mxu0
  %v808 = vpop.f32.mrf.mxu0
  %v809 = vadd.f32 0.0, %v808
  %v810 = vpop.f32.mrf.mxu0
  %811 = vmatprep.mubr.bf16.mxu0 %v466
  %812 = vmatmul.mubr.bf16.gmra.mxu0 %v465
  %v813 = vpop.f32.mrf.mxu0
  %v814 = vadd.f32 0.0, %v813
  %v815 = vpop.f32.mrf.mxu0
  %v816 = vpop.f32.mrf.mxu0
  %v817 = vadd.f32 0.0, %v816
  %v818 = vpop.f32.mrf.mxu0
  %819 = vmatprep.mubr.bf16.mxu0 %v468
  %820 = vmatmul.mubr.bf16.gmra.mxu0 %v467
  %v821 = vpop.f32.mrf.mxu0
  %v822 = vadd.f32 0.0, %v821
  %v823 = vpop.f32.mrf.mxu0
  %v824 = vpop.f32.mrf.mxu0
  %v825 = vadd.f32 0.0, %v824
  %v826 = vpop.f32.mrf.mxu0
  %827 = vmatprep.mubr.bf16.mxu0 %v470
  %828 = vmatmul.mubr.bf16.gmra.mxu0 %v469
  %v829 = vpop.f32.mrf.mxu0
  %v830 = vadd.f32 0.0, %v829
  %v831 = vpop.f32.mrf.mxu0
  %v832 = vpop.f32.mrf.mxu0
  %v833 = vadd.f32 0.0, %v832
  %v834 = vpop.f32.mrf.mxu0
  %835 = vmatprep.mubr.bf16.mxu0 %v472
  %836 = vmatmul.mubr.bf16.gmra.mxu0 %v471
  %v837 = vpop.f32.mrf.mxu0
  %v838 = vadd.f32 0.0, %v837
  %v839 = vpop.f32.mrf.mxu0
  %v840 = vpop.f32.mrf.mxu0
  %v841 = vadd.f32 0.0, %v840
  %v842 = vpop.f32.mrf.mxu0
  %843 = vmatprep.mubr.bf16.mxu0 %v474
  %844 = vmatmul.mubr.bf16.gmra.mxu0 %v473
  %v845 = vpop.f32.mrf.mxu0
  %v846 = vadd.f32 0.0, %v845
  %v847 = vpop.f32.mrf.mxu0
  %v848 = vpop.f32.mrf.mxu0
  %v849 = vadd.f32 0.0, %v848
  %v850 = vpop.f32.mrf.mxu0
  %851 = vmatprep.mubr.bf16.mxu0 %v476
  %852 = vmatmul.mubr.bf16.gmra.mxu0 %v475
  %v853 = vpop.f32.mrf.mxu0
  %v854 = vadd.f32 0.0, %v853
  %v855 = vpop.f32.mrf.mxu0
  %v856 = vpop.f32.mrf.mxu0
  %v857 = vadd.f32 0.0, %v856
  %v858 = vpop.f32.mrf.mxu0
  %859 = vmatprep.mubr.bf16.mxu0 %v478
  %860 = vmatmul.mubr.bf16.gmra.mxu0 %v477
  %v861 = vpop.f32.mrf.mxu0
  %v862 = vadd.f32 0.0, %v861
  %v863 = vpop.f32.mrf.mxu0
  %v864 = vpop.f32.mrf.mxu0
  %v865 = vadd.f32 0.0, %v864
  %v866 = vpop.f32.mrf.mxu0
  %867 = vmatprep.mubr.bf16.mxu0 %v480
  %868 = vmatmul.mubr.bf16.gmra.mxu0 %v479
  %v869 = vpop.f32.mrf.mxu0
  %v870 = vadd.f32 0.0, %v869
  %v871 = vpop.f32.mrf.mxu0
  %v872 = vpop.f32.mrf.mxu0
  %v873 = vadd.f32 0.0, %v872
  %v874 = vpop.f32.mrf.mxu0
  %875 = vmatprep.mubr.bf16.mxu0 %v482
  %876 = vmatmul.mubr.bf16.gmra.mxu0 %v481
  %v877 = vpop.f32.mrf.mxu0
  %v878 = vadd.f32 0.0, %v877
  %v879 = vpop.f32.mrf.mxu0
  %v880 = vpop.f32.mrf.mxu0
  %v881 = vadd.f32 0.0, %v880
  %v882 = vpop.f32.mrf.mxu0
  %883 = vmatprep.mubr.bf16.mxu0 %v484
  %884 = vmatmul.mubr.bf16.gmra.mxu0 %v483
  %v885 = vpop.f32.mrf.mxu0
  %v886 = vadd.f32 0.0, %v885
  %v887 = vpop.f32.mrf.mxu0
  %v888 = vpop.f32.mrf.mxu0
  %v889 = vadd.f32 0.0, %v888
  %v890 = vpop.f32.mrf.mxu0
  %891 = vmatprep.mubr.bf16.mxu0 %v486
  %892 = vmatmul.mubr.bf16.gmra.mxu0 %v485
  %v893 = vpop.f32.mrf.mxu0
  %v894 = vadd.f32 0.0, %v893
  %v895 = vpop.f32.mrf.mxu0
  %v896 = vpop.f32.mrf.mxu0
  %v897 = vadd.f32 0.0, %v896
  %v898 = vpop.f32.mrf.mxu0
  %899 = vmatprep.mubr.bf16.mxu0 %v488
  %900 = vmatmul.mubr.bf16.gmra.mxu0 %v487
  %v901 = vpop.f32.mrf.mxu0
  %v902 = vadd.f32 0.0, %v901
  %v903 = vpop.f32.mrf.mxu0
  %v904 = vpop.f32.mrf.mxu0
  %v905 = vadd.f32 0.0, %v904
  %v906 = vpop.f32.mrf.mxu0
  %907 = vmatprep.mubr.bf16.mxu0 %v490
  %908 = vmatmul.mubr.bf16.gmra.mxu0 %v489
  %v909 = vpop.f32.mrf.mxu0
  %v910 = vadd.f32 0.0, %v909
  %v911 = vpop.f32.mrf.mxu0
  %v912 = vpop.f32.mrf.mxu0
  %v913 = vadd.f32 0.0, %v912
  %v914 = vpop.f32.mrf.mxu0
  %915 = vmatprep.mubr.bf16.mxu0 %v492
  %916 = vmatmul.mubr.bf16.gmra.mxu0 %v491
  %v917 = vpop.f32.mrf.mxu0
  %v918 = vadd.f32 0.0, %v917
  %v919 = vpop.f32.mrf.mxu0
  %v920 = vpop.f32.mrf.mxu0
  %v921 = vadd.f32 0.0, %v920
  %v922 = vpop.f32.mrf.mxu0
  %923 = vmatprep.mubr.bf16.mxu0 %v494
  %924 = vmatmul.mubr.bf16.gmra.mxu0 %v493
  %v925 = vpop.f32.mrf.mxu0
  %v926 = vadd.f32 0.0, %v925
  %v927 = vpop.f32.mrf.mxu0
  %v928 = vpop.f32.mrf.mxu0
  %v929 = vadd.f32 0.0, %v928
  %v930 = vpop.f32.mrf.mxu0
  %931 = vmatprep.mubr.bf16.mxu0 %v496
  %932 = vmatmul.mubr.bf16.gmra.mxu0 %v495
  %v933 = vpop.f32.mrf.mxu0
  %v934 = vadd.f32 0.0, %v933
  %v935 = vpop.f32.mrf.mxu0
  %v936 = vpop.f32.mrf.mxu0
  %v937 = vadd.f32 0.0, %v936
  %v938 = vpop.f32.mrf.mxu0
  %939 = vmatprep.mubr.bf16.mxu0 %v498
  %940 = vmatmul.mubr.bf16.gmra.mxu0 %v497
  %v941 = vpop.f32.mrf.mxu0
  %v942 = vadd.f32 0.0, %v941
  %v943 = vpop.f32.mrf.mxu0
  %v944 = vpop.f32.mrf.mxu0
  %v945 = vadd.f32 0.0, %v944
  %v946 = vpop.f32.mrf.mxu0
  %947 = vdwg.mxu0
  %v948 = vadd.f32 %v83, %v694
  %v949 = vadd.f32 %v84, %v697
  %v950 = vadd.f32 %v85, %v702
  %v951 = vadd.f32 %v86, %v705
  %v952 = vadd.f32 %v87, %v710
  %v953 = vadd.f32 %v88, %v713
  %v954 = vadd.f32 %v89, %v718
  %v955 = vadd.f32 %v90, %v721
  %v956 = vadd.f32 %v91, %v726
  %v957 = vadd.f32 %v92, %v729
  %v958 = vadd.f32 %v93, %v734
  %v959 = vadd.f32 %v94, %v737
  %v960 = vadd.f32 %v95, %v742
  %v961 = vadd.f32 %v96, %v745
  %v962 = vadd.f32 %v97, %v750
  %v963 = vadd.f32 %v98, %v753
  %v964 = vadd.f32 %v99, %v758
  %v965 = vadd.f32 %v100, %v761
  %v966 = vadd.f32 %v101, %v766
  %v967 = vadd.f32 %v102, %v769
  %v968 = vadd.f32 %v103, %v774
  %v969 = vadd.f32 %v104, %v777
  %v970 = vadd.f32 %v105, %v782
  %v971 = vadd.f32 %v106, %v785
  %v972 = vadd.f32 %v107, %v790
  %v973 = vadd.f32 %v108, %v793
  %v974 = vadd.f32 %v109, %v798
  %v975 = vadd.f32 %v110, %v801
  %v976 = vadd.f32 %v111, %v806
  %v977 = vadd.f32 %v112, %v809
  %v978 = vadd.f32 %v113, %v814
  %v979 = vadd.f32 %v114, %v817
  %v980 = vadd.f32 %v115, %v822
  %v981 = vadd.f32 %v116, %v825
  %v982 = vadd.f32 %v117, %v830
  %v983 = vadd.f32 %v118, %v833
  %v984 = vadd.f32 %v119, %v838
  %v985 = vadd.f32 %v120, %v841
  %v986 = vadd.f32 %v121, %v846
  %v987 = vadd.f32 %v122, %v849
  %v988 = vadd.f32 %v123, %v854
  %v989 = vadd.f32 %v124, %v857
  %v990 = vadd.f32 %v125, %v862
  %v991 = vadd.f32 %v126, %v865
  %v992 = vadd.f32 %v127, %v870
  %v993 = vadd.f32 %v128, %v873
  %v994 = vadd.f32 %v129, %v878
  %v995 = vadd.f32 %v130, %v881
  %v996 = vadd.f32 %v131, %v886
  %v997 = vadd.f32 %v132, %v889
  %v998 = vadd.f32 %v133, %v894
  %v999 = vadd.f32 %v134, %v897
  %v1000 = vadd.f32 %v135, %v902
  %v1001 = vadd.f32 %v136, %v905
  %v1002 = vadd.f32 %v137, %v910
  %v1003 = vadd.f32 %v138, %v913
  %v1004 = vadd.f32 %v139, %v918
  %v1005 = vadd.f32 %v140, %v921
  %v1006 = vadd.f32 %v141, %v926
  %v1007 = vadd.f32 %v142, %v929
  %v1008 = vadd.f32 %v143, %v934
  %v1009 = vadd.f32 %v144, %v937
  %v1010 = vadd.f32 %v145, %v942
  %v1011 = vadd.f32 %v146, %v945
  %1012 = vst [vmem:[#allocation2] sm:$0xff] %v948
  %1013 = vst [vmem:[#allocation2 + $0x8] sm:$0xff] %v949
  %1014 = vst [vmem:[#allocation2 + $0x10] sm:$0xff] %v950
  %1015 = vst [vmem:[#allocation2 + $0x18] sm:$0xff] %v951
  %1016 = vst [vmem:[#allocation2 + $0x20] sm:$0xff] %v952
  %1017 = vst [vmem:[#allocation2 + $0x28] sm:$0xff] %v953
  %1018 = vst [vmem:[#allocation2 + $0x30] sm:$0xff] %v954
  %1019 = vst [vmem:[#allocation2 + $0x38] sm:$0xff] %v955
  %1020 = vst [vmem:[#allocation2 + $0x40] sm:$0xff] %v956
  %1021 = vst [vmem:[#allocation2 + $0x48] sm:$0xff] %v957
  %1022 = vst [vmem:[#allocation2 + $0x50] sm:$0xff] %v958
  %1023 = vst [vmem:[#allocation2 + $0x58] sm:$0xff] %v959
  %1024 = vst [vmem:[#allocation2 + $0x60] sm:$0xff] %v960
  %1025 = vst [vmem:[#allocation2 + $0x68] sm:$0xff] %v961
  %1026 = vst [vmem:[#allocation2 + $0x70] sm:$0xff] %v962
  %1027 = vst [vmem:[#allocation2 + $0x78] sm:$0xff] %v963
  %1028 = vst [vmem:[#allocation2 + $0x80] sm:$0xff] %v964
  %1029 = vst [vmem:[#allocation2 + $0x88] sm:$0xff] %v965
  %1030 = vst [vmem:[#allocation2 + $0x90] sm:$0xff] %v966
  %1031 = vst [vmem:[#allocation2 + $0x98] sm:$0xff] %v967
  %1032 = vst [vmem:[#allocation2 + $0xa0] sm:$0xff] %v968
  %1033 = vst [vmem:[#allocation2 + $0xa8] sm:$0xff] %v969
  %1034 = vst [vmem:[#allocation2 + $0xb0] sm:$0xff] %v970
  %1035 = vst [vmem:[#allocation2 + $0xb8] sm:$0xff] %v971
  %1036 = vst [vmem:[#allocation2 + $0xc0] sm:$0xff] %v972
  %1037 = vst [vmem:[#allocation2 + $0xc8] sm:$0xff] %v973
  %1038 = vst [vmem:[#allocation2 + $0xd0] sm:$0xff] %v974
  %1039 = vst [vmem:[#allocation2 + $0xd8] sm:$0xff] %v975
  %1040 = vst [vmem:[#allocation2 + $0xe0] sm:$0xff] %v976
  %1041 = vst [vmem:[#allocation2 + $0xe8] sm:$0xff] %v977
  %1042 = vst [vmem:[#allocation2 + $0xf0] sm:$0xff] %v978
  %1043 = vst [vmem:[#allocation2 + $0xf8] sm:$0xff] %v979
  %1044 = vst [vmem:[#allocation2 + $0x100] sm:$0xff] %v980
  %1045 = vst [vmem:[#allocation2 + $0x108] sm:$0xff] %v981
  %1046 = vst [vmem:[#allocation2 + $0x110] sm:$0xff] %v982
  %1047 = vst [vmem:[#allocation2 + $0x118] sm:$0xff] %v983
  %1048 = vst [vmem:[#allocation2 + $0x120] sm:$0xff] %v984
  %1049 = vst [vmem:[#allocation2 + $0x128] sm:$0xff] %v985
  %1050 = vst [vmem:[#allocation2 + $0x130] sm:$0xff] %v986
  %1051 = vst [vmem:[#allocation2 + $0x138] sm:$0xff] %v987
  %1052 = vst [vmem:[#allocation2 + $0x140] sm:$0xff] %v988
  %1053 = vst [vmem:[#allocation2 + $0x148] sm:$0xff] %v989
  %1054 = vst [vmem:[#allocation2 + $0x150] sm:$0xff] %v990
  %1055 = vst [vmem:[#allocation2 + $0x158] sm:$0xff] %v991
  %1056 = vst [vmem:[#allocation2 + $0x160] sm:$0xff] %v992
  %1057 = vst [vmem:[#allocation2 + $0x168] sm:$0xff] %v993
  %1058 = vst [vmem:[#allocation2 + $0x170] sm:$0xff] %v994
  %1059 = vst [vmem:[#allocation2 + $0x178] sm:$0xff] %v995
  %1060 = vst [vmem:[#allocation2 + $0x180] sm:$0xff] %v996
  %1061 = vst [vmem:[#allocation2 + $0x188] sm:$0xff] %v997
  %1062 = vst [vmem:[#allocation2 + $0x190] sm:$0xff] %v998
  %1063 = vst [vmem:[#allocation2 + $0x198] sm:$0xff] %v999
  %1064 = vst [vmem:[#allocation2 + $0x1a0] sm:$0xff] %v1000
  %1065 = vst [vmem:[#allocation2 + $0x1a8] sm:$0xff] %v1001
  %1066 = vst [vmem:[#allocation2 + $0x1b0] sm:$0xff] %v1002
  %1067 = vst [vmem:[#allocation2 + $0x1b8] sm:$0xff] %v1003
  %1068 = vst [vmem:[#allocation2 + $0x1c0] sm:$0xff] %v1004
  %1069 = vst [vmem:[#allocation2 + $0x1c8] sm:$0xff] %v1005
  %1070 = vst [vmem:[#allocation2 + $0x1d0] sm:$0xff] %v1006
  %1071 = vst [vmem:[#allocation2 + $0x1d8] sm:$0xff] %v1007
  %1072 = vst [vmem:[#allocation2 + $0x1e0] sm:$0xff] %v1008
  %1073 = vst [vmem:[#allocation2 + $0x1e8] sm:$0xff] %v1009
  %1074 = vst [vmem:[#allocation2 + $0x1f0] sm:$0xff] %v1010
  %1075 = vst [vmem:[#allocation2 + $0x1f8] sm:$0xff] %v1011
  // Predicated region
  $region14: #{conv_bn.2} parent=0 // pred_check
    %p1076 = pneg %p14
  $region15: #{conv_bn.2} parent=0 // pred_check_branch
    %1078 = sbr.rel (%p1076) target = $region17
  $region16: #{conv_bn.2} parent=0 // pred_region
    %v1079 = vld [vmem:[#allocation2] sm:$0xff]
    %v1080 = vld [vmem:[#allocation2 + $0x8] sm:$0xff]
    %v1081 = vld [vmem:[#allocation2 + $0x10] sm:$0xff]
    %v1082 = vld [vmem:[#allocation2 + $0x18] sm:$0xff]
    %v1083 = vld [vmem:[#allocation2 + $0x20] sm:$0xff]
    %v1084 = vld [vmem:[#allocation2 + $0x28] sm:$0xff]
    %v1085 = vld [vmem:[#allocation2 + $0x30] sm:$0xff]
    %v1086 = vld [vmem:[#allocation2 + $0x38] sm:$0xff]
    %v1087 = vld [vmem:[#allocation2 + $0x40] sm:$0xff]
    %v1088 = vld [vmem:[#allocation2 + $0x48] sm:$0xff]
    %v1089 = vld [vmem:[#allocation2 + $0x50] sm:$0xff]
    %v1090 = vld [vmem:[#allocation2 + $0x58] sm:$0xff]
    %v1091 = vld [vmem:[#allocation2 + $0x60] sm:$0xff]
    %v1092 = vld [vmem:[#allocation2 + $0x68] sm:$0xff]
    %v1093 = vld [vmem:[#allocation2 + $0x70] sm:$0xff]
    %v1094 = vld [vmem:[#allocation2 + $0x78] sm:$0xff]
    %v1095 = vld [vmem:[#allocation2 + $0x80] sm:$0xff]
    %v1096 = vld [vmem:[#allocation2 + $0x88] sm:$0xff]
    %v1097 = vld [vmem:[#allocation2 + $0x90] sm:$0xff]
    %v1098 = vld [vmem:[#allocation2 + $0x98] sm:$0xff]
    %v1099 = vld [vmem:[#allocation2 + $0xa0] sm:$0xff]
    %v1100 = vld [vmem:[#allocation2 + $0xa8] sm:$0xff]
    %v1101 = vld [vmem:[#allocation2 + $0xb0] sm:$0xff]
    %v1102 = vld [vmem:[#allocation2 + $0xb8] sm:$0xff]
    %v1103 = vld [vmem:[#allocation2 + $0xc0] sm:$0xff]
    %v1104 = vld [vmem:[#allocation2 + $0xc8] sm:$0xff]
    %v1105 = vld [vmem:[#allocation2 + $0xd0] sm:$0xff]
    %v1106 = vld [vmem:[#allocation2 + $0xd8] sm:$0xff]
    %v1107 = vld [vmem:[#allocation2 + $0xe0] sm:$0xff]
    %v1108 = vld [vmem:[#allocation2 + $0xe8] sm:$0xff]
    %v1109 = vld [vmem:[#allocation2 + $0xf0] sm:$0xff]
    %v1110 = vld [vmem:[#allocation2 + $0xf8] sm:$0xff]
    %v1111 = vld [vmem:[#allocation2 + $0x100] sm:$0xff]
    %v1112 = vld [vmem:[#allocation2 + $0x108] sm:$0xff]
    %v1113 = vld [vmem:[#allocation2 + $0x110] sm:$0xff]
    %v1114 = vld [vmem:[#allocation2 + $0x118] sm:$0xff]
    %v1115 = vld [vmem:[#allocation2 + $0x120] sm:$0xff]
    %v1116 = vld [vmem:[#allocation2 + $0x128] sm:$0xff]
    %v1117 = vld [vmem:[#allocation2 + $0x130] sm:$0xff]
    %v1118 = vld [vmem:[#allocation2 + $0x138] sm:$0xff]
    %v1119 = vld [vmem:[#allocation2 + $0x140] sm:$0xff]
    %v1120 = vld [vmem:[#allocation2 + $0x148] sm:$0xff]
    %v1121 = vld [vmem:[#allocation2 + $0x150] sm:$0xff]
    %v1122 = vld [vmem:[#allocation2 + $0x158] sm:$0xff]
    %v1123 = vld [vmem:[#allocation2 + $0x160] sm:$0xff]
    %v1124 = vld [vmem:[#allocation2 + $0x168] sm:$0xff]
    %v1125 = vld [vmem:[#allocation2 + $0x170] sm:$0xff]
    %v1126 = vld [vmem:[#allocation2 + $0x178] sm:$0xff]
    %v1127 = vld [vmem:[#allocation2 + $0x180] sm:$0xff]
    %v1128 = vld [vmem:[#allocation2 + $0x188] sm:$0xff]
    %v1129 = vld [vmem:[#allocation2 + $0x190] sm:$0xff]
    %v1130 = vld [vmem:[#allocation2 + $0x198] sm:$0xff]
    %v1131 = vld [vmem:[#allocation2 + $0x1a0] sm:$0xff]
    %v1132 = vld [vmem:[#allocation2 + $0x1a8] sm:$0xff]
    %v1133 = vld [vmem:[#allocation2 + $0x1b0] sm:$0xff]
    %v1134 = vld [vmem:[#allocation2 + $0x1b8] sm:$0xff]
    %v1135 = vld [vmem:[#allocation2 + $0x1c0] sm:$0xff]
    %v1136 = vld [vmem:[#allocation2 + $0x1c8] sm:$0xff]
    %v1137 = vld [vmem:[#allocation2 + $0x1d0] sm:$0xff]
    %v1138 = vld [vmem:[#allocation2 + $0x1d8] sm:$0xff]
    %v1139 = vld [vmem:[#allocation2 + $0x1e0] sm:$0xff]
    %v1140 = vld [vmem:[#allocation2 + $0x1e8] sm:$0xff]
    %v1141 = vld [vmem:[#allocation2 + $0x1f0] sm:$0xff]
    %v1142 = vld [vmem:[#allocation2 + $0x1f8] sm:$0xff]
    %v1143 = vpack.c.bf16 %v1080, %v1079
    %v1144 = vpack.c.bf16 %v1082, %v1081
    %v1145 = vpack.c.bf16 %v1084, %v1083
    %v1146 = vpack.c.bf16 %v1086, %v1085
    %v1147 = vpack.c.bf16 %v1088, %v1087
    %v1148 = vpack.c.bf16 %v1090, %v1089
    %v1149 = vpack.c.bf16 %v1092, %v1091
    %v1150 = vpack.c.bf16 %v1094, %v1093
    %v1151 = vpack.c.bf16 %v1096, %v1095
    %v1152 = vpack.c.bf16 %v1098, %v1097
    %v1153 = vpack.c.bf16 %v1100, %v1099
    %v1154 = vpack.c.bf16 %v1102, %v1101
    %v1155 = vpack.c.bf16 %v1104, %v1103
    %v1156 = vpack.c.bf16 %v1106, %v1105
    %v1157 = vpack.c.bf16 %v1108, %v1107
    %v1158 = vpack.c.bf16 %v1110, %v1109
    %v1159 = vpack.c.bf16 %v1112, %v1111
    %v1160 = vpack.c.bf16 %v1114, %v1113
    %v1161 = vpack.c.bf16 %v1116, %v1115
    %v1162 = vpack.c.bf16 %v1118, %v1117
    %v1163 = vpack.c.bf16 %v1120, %v1119
    %v1164 = vpack.c.bf16 %v1122, %v1121
    %v1165 = vpack.c.bf16 %v1124, %v1123
    %v1166 = vpack.c.bf16 %v1126, %v1125
    %v1167 = vpack.c.bf16 %v1128, %v1127
    %v1168 = vpack.c.bf16 %v1130, %v1129
    %v1169 = vpack.c.bf16 %v1132, %v1131
    %v1170 = vpack.c.bf16 %v1134, %v1133
    %v1171 = vpack.c.bf16 %v1136, %v1135
    %v1172 = vpack.c.bf16 %v1138, %v1137
    %v1173 = vpack.c.bf16 %v1140, %v1139
    %v1174 = vpack.c.bf16 %v1142, %v1141
    %v1207 = vunpack.c.l.b16 %v1143
    %v1208 = vunpack.c.h.b16 %v1143
    %v1209 = vunpack.c.l.b16 %v1144
    %v1210 = vunpack.c.h.b16 %v1144
    %v1211 = vunpack.c.l.b16 %v1145
    %v1212 = vunpack.c.h.b16 %v1145
    %v1213 = vunpack.c.l.b16 %v1146
    %v1214 = vunpack.c.h.b16 %v1146
    %v1215 = vunpack.c.l.b16 %v1147
    %v1216 = vunpack.c.h.b16 %v1147
    %v1217 = vunpack.c.l.b16 %v1148
    %v1218 = vunpack.c.h.b16 %v1148
    %v1219 = vunpack.c.l.b16 %v1149
    %v1220 = vunpack.c.h.b16 %v1149
    %v1221 = vunpack.c.l.b16 %v1150
    %v1222 = vunpack.c.h.b16 %v1150
    %v1223 = vunpack.c.l.b16 %v1151
    %v1224 = vunpack.c.h.b16 %v1151
    %v1225 = vunpack.c.l.b16 %v1152
    %v1226 = vunpack.c.h.b16 %v1152
    %v1227 = vunpack.c.l.b16 %v1153
    %v1228 = vunpack.c.h.b16 %v1153
    %v1229 = vunpack.c.l.b16 %v1154
    %v1230 = vunpack.c.h.b16 %v1154
    %v1231 = vunpack.c.l.b16 %v1155
    %v1232 = vunpack.c.h.b16 %v1155
    %v1233 = vunpack.c.l.b16 %v1156
    %v1234 = vunpack.c.h.b16 %v1156
    %v1235 = vunpack.c.l.b16 %v1157
    %v1236 = vunpack.c.h.b16 %v1157
    %v1237 = vunpack.c.l.b16 %v1158
    %v1238 = vunpack.c.h.b16 %v1158
    %v1239 = vunpack.c.l.b16 %v1159
    %v1240 = vunpack.c.h.b16 %v1159
    %v1241 = vunpack.c.l.b16 %v1160
    %v1242 = vunpack.c.h.b16 %v1160
    %v1243 = vunpack.c.l.b16 %v1161
    %v1244 = vunpack.c.h.b16 %v1161
    %v1245 = vunpack.c.l.b16 %v1162
    %v1246 = vunpack.c.h.b16 %v1162
    %v1247 = vunpack.c.l.b16 %v1163
    %v1248 = vunpack.c.h.b16 %v1163
    %v1249 = vunpack.c.l.b16 %v1164
    %v1250 = vunpack.c.h.b16 %v1164
    %v1251 = vunpack.c.l.b16 %v1165
    %v1252 = vunpack.c.h.b16 %v1165
    %v1253 = vunpack.c.l.b16 %v1166
    %v1254 = vunpack.c.h.b16 %v1166
    %v1255 = vunpack.c.l.b16 %v1167
    %v1256 = vunpack.c.h.b16 %v1167
    %v1257 = vunpack.c.l.b16 %v1168
    %v1258 = vunpack.c.h.b16 %v1168
    %v1259 = vunpack.c.l.b16 %v1169
    %v1260 = vunpack.c.h.b16 %v1169
    %v1261 = vunpack.c.l.b16 %v1170
    %v1262 = vunpack.c.h.b16 %v1170
    %v1263 = vunpack.c.l.b16 %v1171
    %v1264 = vunpack.c.h.b16 %v1171
    %v1265 = vunpack.c.l.b16 %v1172
    %v1266 = vunpack.c.h.b16 %v1172
    %v1267 = vunpack.c.l.b16 %v1173
    %v1268 = vunpack.c.h.b16 %v1173
    %v1269 = vunpack.c.l.b16 %v1174
    %v1270 = vunpack.c.h.b16 %v1174
    %v1271 = vpack.c.b16 %v1207, %v1207
    %v1272 = vpack.c.b16 %v1208, %v1208
    %v1273 = vpack.c.b16 %v1209, %v1209
    %v1274 = vpack.c.b16 %v1210, %v1210
    %v1275 = vpack.c.b16 %v1211, %v1211
    %v1276 = vpack.c.b16 %v1212, %v1212
    %v1277 = vpack.c.b16 %v1213, %v1213
    %v1278 = vpack.c.b16 %v1214, %v1214
    %v1279 = vpack.c.b16 %v1215, %v1215
    %v1280 = vpack.c.b16 %v1216, %v1216
    %v1281 = vpack.c.b16 %v1217, %v1217
    %v1282 = vpack.c.b16 %v1218, %v1218
    %v1283 = vpack.c.b16 %v1219, %v1219
    %v1284 = vpack.c.b16 %v1220, %v1220
    %v1285 = vpack.c.b16 %v1221, %v1221
    %v1286 = vpack.c.b16 %v1222, %v1222
    %v1287 = vpack.c.b16 %v1223, %v1223
    %v1288 = vpack.c.b16 %v1224, %v1224
    %v1289 = vpack.c.b16 %v1225, %v1225
    %v1290 = vpack.c.b16 %v1226, %v1226
    %v1291 = vpack.c.b16 %v1227, %v1227
    %v1292 = vpack.c.b16 %v1228, %v1228
    %v1293 = vpack.c.b16 %v1229, %v1229
    %v1294 = vpack.c.b16 %v1230, %v1230
    %v1295 = vpack.c.b16 %v1231, %v1231
    %v1296 = vpack.c.b16 %v1232, %v1232
    %v1297 = vpack.c.b16 %v1233, %v1233
    %v1298 = vpack.c.b16 %v1234, %v1234
    %v1299 = vpack.c.b16 %v1235, %v1235
    %v1300 = vpack.c.b16 %v1236, %v1236
    %v1301 = vpack.c.b16 %v1237, %v1237
    %v1302 = vpack.c.b16 %v1238, %v1238
    %v1303 = vpack.c.b16 %v1239, %v1239
    %v1304 = vpack.c.b16 %v1240, %v1240
    %v1305 = vpack.c.b16 %v1241, %v1241
    %v1306 = vpack.c.b16 %v1242, %v1242
    %v1307 = vpack.c.b16 %v1243, %v1243
    %v1308 = vpack.c.b16 %v1244, %v1244
    %v1309 = vpack.c.b16 %v1245, %v1245
    %v1310 = vpack.c.b16 %v1246, %v1246
    %v1311 = vpack.c.b16 %v1247, %v1247
    %v1312 = vpack.c.b16 %v1248, %v1248
    %v1313 = vpack.c.b16 %v1249, %v1249
    %v1314 = vpack.c.b16 %v1250, %v1250
    %v1315 = vpack.c.b16 %v1251, %v1251
    %v1316 = vpack.c.b16 %v1252, %v1252
    %v1317 = vpack.c.b16 %v1253, %v1253
    %v1318 = vpack.c.b16 %v1254, %v1254
    %v1319 = vpack.c.b16 %v1255, %v1255
    %v1320 = vpack.c.b16 %v1256, %v1256
    %v1321 = vpack.c.b16 %v1257, %v1257
    %v1322 = vpack.c.b16 %v1258, %v1258
    %v1323 = vpack.c.b16 %v1259, %v1259
    %v1324 = vpack.c.b16 %v1260, %v1260
    %v1325 = vpack.c.b16 %v1261, %v1261
    %v1326 = vpack.c.b16 %v1262, %v1262
    %v1327 = vpack.c.b16 %v1263, %v1263
    %v1328 = vpack.c.b16 %v1264, %v1264
    %v1329 = vpack.c.b16 %v1265, %v1265
    %v1330 = vpack.c.b16 %v1266, %v1266
    %v1331 = vpack.c.b16 %v1267, %v1267
    %v1332 = vpack.c.b16 %v1268, %v1268
    %v1333 = vpack.c.b16 %v1269, %v1269
    %v1334 = vpack.c.b16 %v1270, %v1270
    %1399 = vst [vmem:[%s2] sm:$0xf] %v1271
    %1400 = vst [vmem:[%s2 + $0x4] sm:$0xf] %v1272
    %1401 = vst [vmem:[%s2 + $0x8] sm:$0xf] %v1273
    %1402 = vst [vmem:[%s2 + $0xc] sm:$0xf] %v1274
    %1403 = vst [vmem:[%s2 + $0x10] sm:$0xf] %v1275
    %1404 = vst [vmem:[%s2 + $0x14] sm:$0xf] %v1276
    %1405 = vst [vmem:[%s2 + $0x18] sm:$0xf] %v1277
    %1406 = vst [vmem:[%s2 + $0x1c] sm:$0xf] %v1278
    %1407 = vst [vmem:[%s2 + $0x20] sm:$0xf] %v1279
    %1408 = vst [vmem:[%s2 + $0x24] sm:$0xf] %v1280
    %1409 = vst [vmem:[%s2 + $0x28] sm:$0xf] %v1281
    %1410 = vst [vmem:[%s2 + $0x2c] sm:$0xf] %v1282
    %1411 = vst [vmem:[%s2 + $0x30] sm:$0xf] %v1283
    %1412 = vst [vmem:[%s2 + $0x34] sm:$0xf] %v1284
    %1413 = vst [vmem:[%s2 + $0x38] sm:$0xf] %v1285
    %1414 = vst [vmem:[%s2 + $0x3c] sm:$0xf] %v1286
    %1415 = vst [vmem:[%s2 + $0x40] sm:$0xf] %v1287
    %1416 = vst [vmem:[%s2 + $0x44] sm:$0xf] %v1288
    %1417 = vst [vmem:[%s2 + $0x48] sm:$0xf] %v1289
    %1418 = vst [vmem:[%s2 + $0x4c] sm:$0xf] %v1290
    %1419 = vst [vmem:[%s2 + $0x50] sm:$0xf] %v1291
    %1420 = vst [vmem:[%s2 + $0x54] sm:$0xf] %v1292
    %1421 = vst [vmem:[%s2 + $0x58] sm:$0xf] %v1293
    %1422 = vst [vmem:[%s2 + $0x5c] sm:$0xf] %v1294
    %1423 = vst [vmem:[%s2 + $0x60] sm:$0xf] %v1295
    %1424 = vst [vmem:[%s2 + $0x64] sm:$0xf] %v1296
    %1425 = vst [vmem:[%s2 + $0x68] sm:$0xf] %v1297
    %1426 = vst [vmem:[%s2 + $0x6c] sm:$0xf] %v1298
    %1427 = vst [vmem:[%s2 + $0x70] sm:$0xf] %v1299
    %1428 = vst [vmem:[%s2 + $0x74] sm:$0xf] %v1300
    %1429 = vst [vmem:[%s2 + $0x78] sm:$0xf] %v1301
    %1430 = vst [vmem:[%s2 + $0x7c] sm:$0xf] %v1302
    %1431 = vst [vmem:[%s2 + $0x80] sm:$0xf] %v1303
    %1432 = vst [vmem:[%s2 + $0x84] sm:$0xf] %v1304
    %1433 = vst [vmem:[%s2 + $0x88] sm:$0xf] %v1305
    %1434 = vst [vmem:[%s2 + $0x8c] sm:$0xf] %v1306
    %1435 = vst [vmem:[%s2 + $0x90] sm:$0xf] %v1307
    %1436 = vst [vmem:[%s2 + $0x94] sm:$0xf] %v1308
    %1437 = vst [vmem:[%s2 + $0x98] sm:$0xf] %v1309
    %1438 = vst [vmem:[%s2 + $0x9c] sm:$0xf] %v1310
    %1439 = vst [vmem:[%s2 + $0xa0] sm:$0xf] %v1311
    %1440 = vst [vmem:[%s2 + $0xa4] sm:$0xf] %v1312
    %1441 = vst [vmem:[%s2 + $0xa8] sm:$0xf] %v1313
    %1442 = vst [vmem:[%s2 + $0xac] sm:$0xf] %v1314
    %1443 = vst [vmem:[%s2 + $0xb0] sm:$0xf] %v1315
    %1444 = vst [vmem:[%s2 + $0xb4] sm:$0xf] %v1316
    %1445 = vst [vmem:[%s2 + $0xb8] sm:$0xf] %v1317
    %1446 = vst [vmem:[%s2 + $0xbc] sm:$0xf] %v1318
    %1447 = vst [vmem:[%s2 + $0xc0] sm:$0xf] %v1319
    %1448 = vst [vmem:[%s2 + $0xc4] sm:$0xf] %v1320
    %1449 = vst [vmem:[%s2 + $0xc8] sm:$0xf] %v1321
    %1450 = vst [vmem:[%s2 + $0xcc] sm:$0xf] %v1322
    %1451 = vst [vmem:[%s2 + $0xd0] sm:$0xf] %v1323
    %1452 = vst [vmem:[%s2 + $0xd4] sm:$0xf] %v1324
    %1453 = vst [vmem:[%s2 + $0xd8] sm:$0xf] %v1325
    %1454 = vst [vmem:[%s2 + $0xdc] sm:$0xf] %v1326
    %1455 = vst [vmem:[%s2 + $0xe0] sm:$0xf] %v1327
    %1456 = vst [vmem:[%s2 + $0xe4] sm:$0xf] %v1328
    %1457 = vst [vmem:[%s2 + $0xe8] sm:$0xf] %v1329
    %1458 = vst [vmem:[%s2 + $0xec] sm:$0xf] %v1330
    %1459 = vst [vmem:[%s2 + $0xf0] sm:$0xf] %v1331
    %1460 = vst [vmem:[%s2 + $0xf4] sm:$0xf] %v1332
    %1461 = vst [vmem:[%s2 + $0xf8] sm:$0xf] %v1333
    %1462 = vst [vmem:[%s2 + $0xfc] sm:$0xf] %v1334
    %v1463 = vunpack.c.l.bf16 %v1143
    %v1464 = vunpack.c.h.bf16 %v1143
    %v1465 = vunpack.c.l.bf16 %v1144
    %v1466 = vunpack.c.h.bf16 %v1144
    %v1467 = vunpack.c.l.bf16 %v1145
    %v1468 = vunpack.c.h.bf16 %v1145
    %v1469 = vunpack.c.l.bf16 %v1146
    %v1470 = vunpack.c.h.bf16 %v1146
    %v1471 = vunpack.c.l.bf16 %v1147
    %v1472 = vunpack.c.h.bf16 %v1147
    %v1473 = vunpack.c.l.bf16 %v1148
    %v1474 = vunpack.c.h.bf16 %v1148
    %v1475 = vunpack.c.l.bf16 %v1149
    %v1476 = vunpack.c.h.bf16 %v1149
    %v1477 = vunpack.c.l.bf16 %v1150
    %v1478 = vunpack.c.h.bf16 %v1150
    %v1479 = vunpack.c.l.bf16 %v1151
    %v1480 = vunpack.c.h.bf16 %v1151
    %v1481 = vunpack.c.l.bf16 %v1152
    %v1482 = vunpack.c.h.bf16 %v1152
    %v1483 = vunpack.c.l.bf16 %v1153
    %v1484 = vunpack.c.h.bf16 %v1153
    %v1485 = vunpack.c.l.bf16 %v1154
    %v1486 = vunpack.c.h.bf16 %v1154
    %v1487 = vunpack.c.l.bf16 %v1155
    %v1488 = vunpack.c.h.bf16 %v1155
    %v1489 = vunpack.c.l.bf16 %v1156
    %v1490 = vunpack.c.h.bf16 %v1156
    %v1491 = vunpack.c.l.bf16 %v1157
    %v1492 = vunpack.c.h.bf16 %v1157
    %v1493 = vunpack.c.l.bf16 %v1158
    %v1494 = vunpack.c.h.bf16 %v1158
    %v1495 = vunpack.c.l.bf16 %v1159
    %v1496 = vunpack.c.h.bf16 %v1159
    %v1497 = vunpack.c.l.bf16 %v1160
    %v1498 = vunpack.c.h.bf16 %v1160
    %v1499 = vunpack.c.l.bf16 %v1161
    %v1500 = vunpack.c.h.bf16 %v1161
    %v1501 = vunpack.c.l.bf16 %v1162
    %v1502 = vunpack.c.h.bf16 %v1162
    %v1503 = vunpack.c.l.bf16 %v1163
    %v1504 = vunpack.c.h.bf16 %v1163
    %v1505 = vunpack.c.l.bf16 %v1164
    %v1506 = vunpack.c.h.bf16 %v1164
    %v1507 = vunpack.c.l.bf16 %v1165
    %v1508 = vunpack.c.h.bf16 %v1165
    %v1509 = vunpack.c.l.bf16 %v1166
    %v1510 = vunpack.c.h.bf16 %v1166
    %v1511 = vunpack.c.l.bf16 %v1167
    %v1512 = vunpack.c.h.bf16 %v1167
    %v1513 = vunpack.c.l.bf16 %v1168
    %v1514 = vunpack.c.h.bf16 %v1168
    %v1515 = vunpack.c.l.bf16 %v1169
    %v1516 = vunpack.c.h.bf16 %v1169
    %v1517 = vunpack.c.l.bf16 %v1170
    %v1518 = vunpack.c.h.bf16 %v1170
    %v1519 = vunpack.c.l.bf16 %v1171
    %v1520 = vunpack.c.h.bf16 %v1171
    %v1521 = vunpack.c.l.bf16 %v1172
    %v1522 = vunpack.c.h.bf16 %v1172
    %v1523 = vunpack.c.l.bf16 %v1173
    %v1524 = vunpack.c.h.bf16 %v1173
    %v1525 = vunpack.c.l.bf16 %v1174
    %v1526 = vunpack.c.h.bf16 %v1174
    %v1527 = vadd.f32 %v1463, %v1464
    %v1528 = vadd.f32 %v1527, %v1465
    %v1529 = vadd.f32 %v1528, %v1466
    %v1530 = vadd.f32 %v1529, %v1467
    %v1531 = vadd.f32 %v1530, %v1468
    %v1532 = vadd.f32 %v1531, %v1469
    %v1533 = vadd.f32 %v1532, %v1470
    %v1534 = vadd.f32 %v1533, %v1471
    %v1535 = vadd.f32 %v1534, %v1472
    %v1536 = vadd.f32 %v1535, %v1473
    %v1537 = vadd.f32 %v1536, %v1474
    %v1538 = vadd.f32 %v1537, %v1475
    %v1539 = vadd.f32 %v1538, %v1476
    %v1540 = vadd.f32 %v1539, %v1477
    %v1541 = vadd.f32 %v1540, %v1478
    %v1542 = vadd.f32 %v1541, %v1479
    %v1543 = vadd.f32 %v1542, %v1480
    %v1544 = vadd.f32 %v1543, %v1481
    %v1545 = vadd.f32 %v1544, %v1482
    %v1546 = vadd.f32 %v1545, %v1483
    %v1547 = vadd.f32 %v1546, %v1484
    %v1548 = vadd.f32 %v1547, %v1485
    %v1549 = vadd.f32 %v1548, %v1486
    %v1550 = vadd.f32 %v1549, %v1487
    %v1551 = vadd.f32 %v1550, %v1488
    %v1552 = vadd.f32 %v1551, %v1489
    %v1553 = vadd.f32 %v1552, %v1490
    %v1554 = vadd.f32 %v1553, %v1491
    %v1555 = vadd.f32 %v1554, %v1492
    %v1556 = vadd.f32 %v1555, %v1493
    %v1557 = vadd.f32 %v1556, %v1494
    %v1558 = vadd.f32 %v1557, %v1495
    %v1559 = vadd.f32 %v1558, %v1496
    %v1560 = vadd.f32 %v1559, %v1497
    %v1561 = vadd.f32 %v1560, %v1498
    %v1562 = vadd.f32 %v1561, %v1499
    %v1563 = vadd.f32 %v1562, %v1500
    %v1564 = vadd.f32 %v1563, %v1501
    %v1565 = vadd.f32 %v1564, %v1502
    %v1566 = vadd.f32 %v1565, %v1503
    %v1567 = vadd.f32 %v1566, %v1504
    %v1568 = vadd.f32 %v1567, %v1505
    %v1569 = vadd.f32 %v1568, %v1506
    %v1570 = vadd.f32 %v1569, %v1507
    %v1571 = vadd.f32 %v1570, %v1508
    %v1572 = vadd.f32 %v1571, %v1509
    %v1573 = vadd.f32 %v1572, %v1510
    %v1574 = vadd.f32 %v1573, %v1511
    %v1575 = vadd.f32 %v1574, %v1512
    %v1576 = vadd.f32 %v1575, %v1513
    %v1577 = vadd.f32 %v1576, %v1514
    %v1578 = vadd.f32 %v1577, %v1515
    %v1579 = vadd.f32 %v1578, %v1516
    %v1580 = vadd.f32 %v1579, %v1517
    %v1581 = vadd.f32 %v1580, %v1518
    %v1582 = vadd.f32 %v1581, %v1519
    %v1583 = vadd.f32 %v1582, %v1520
    %v1584 = vadd.f32 %v1583, %v1521
    %v1585 = vadd.f32 %v1584, %v1522
    %v1586 = vadd.f32 %v1585, %v1523
    %v1587 = vadd.f32 %v1586, %v1524
    %v1588 = vadd.f32 %v1587, %v1525
    %v1589 = vadd.f32 %v1588, %v1526
    %v1590 = vrot.slane %v1589, 4
    %v1591 = vadd.f32 %v1589, %v1590
    %v1592 = vrot.slane %v1591, 2
    %v1593 = vadd.f32 %v1591, %v1592
    %v1594 = vrot.slane %v1593, 1
    %v1595 = vadd.f32 %v1593, %v1594
    %1596 = vst [vmem:[%s3] sm:$0x1] %v1595
    %v1597 = vmul.f32 %v1463, %v1463
    %v1598 = vmul.f32 %v1464, %v1464
    %v1599 = vmul.f32 %v1465, %v1465
    %v1600 = vmul.f32 %v1466, %v1466
    %v1601 = vmul.f32 %v1467, %v1467
    %v1602 = vmul.f32 %v1468, %v1468
    %v1603 = vmul.f32 %v1469, %v1469
    %v1604 = vmul.f32 %v1470, %v1470
    %v1605 = vmul.f32 %v1471, %v1471
    %v1606 = vmul.f32 %v1472, %v1472
    %v1607 = vmul.f32 %v1473, %v1473
    %v1608 = vmul.f32 %v1474, %v1474
    %v1609 = vmul.f32 %v1475, %v1475
    %v1610 = vmul.f32 %v1476, %v1476
    %v1611 = vmul.f32 %v1477, %v1477
    %v1612 = vmul.f32 %v1478, %v1478
    %v1613 = vmul.f32 %v1479, %v1479
    %v1614 = vmul.f32 %v1480, %v1480
    %v1615 = vmul.f32 %v1481, %v1481
    %v1616 = vmul.f32 %v1482, %v1482
    %v1617 = vmul.f32 %v1483, %v1483
    %v1618 = vmul.f32 %v1484, %v1484
    %v1619 = vmul.f32 %v1485, %v1485
    %v1620 = vmul.f32 %v1486, %v1486
    %v1621 = vmul.f32 %v1487, %v1487
    %v1622 = vmul.f32 %v1488, %v1488
    %v1623 = vmul.f32 %v1489, %v1489
    %v1624 = vmul.f32 %v1490, %v1490
    %v1625 = vmul.f32 %v1491, %v1491
    %v1626 = vmul.f32 %v1492, %v1492
    %v1627 = vmul.f32 %v1493, %v1493
    %v1628 = vmul.f32 %v1494, %v1494
    %v1629 = vmul.f32 %v1495, %v1495
    %v1630 = vmul.f32 %v1496, %v1496
    %v1631 = vmul.f32 %v1497, %v1497
    %v1632 = vmul.f32 %v1498, %v1498
    %v1633 = vmul.f32 %v1499, %v1499
    %v1634 = vmul.f32 %v1500, %v1500
    %v1635 = vmul.f32 %v1501, %v1501
    %v1636 = vmul.f32 %v1502, %v1502
    %v1637 = vmul.f32 %v1503, %v1503
    %v1638 = vmul.f32 %v1504, %v1504
    %v1639 = vmul.f32 %v1505, %v1505
    %v1640 = vmul.f32 %v1506, %v1506
    %v1641 = vmul.f32 %v1507, %v1507
    %v1642 = vmul.f32 %v1508, %v1508
    %v1643 = vmul.f32 %v1509, %v1509
    %v1644 = vmul.f32 %v1510, %v1510
    %v1645 = vmul.f32 %v1511, %v1511
    %v1646 = vmul.f32 %v1512, %v1512
    %v1647 = vmul.f32 %v1513, %v1513
    %v1648 = vmul.f32 %v1514, %v1514
    %v1649 = vmul.f32 %v1515, %v1515
    %v1650 = vmul.f32 %v1516, %v1516
    %v1651 = vmul.f32 %v1517, %v1517
    %v1652 = vmul.f32 %v1518, %v1518
    %v1653 = vmul.f32 %v1519, %v1519
    %v1654 = vmul.f32 %v1520, %v1520
    %v1655 = vmul.f32 %v1521, %v1521
    %v1656 = vmul.f32 %v1522, %v1522
    %v1657 = vmul.f32 %v1523, %v1523
    %v1658 = vmul.f32 %v1524, %v1524
    %v1659 = vmul.f32 %v1525, %v1525
    %v1660 = vmul.f32 %v1526, %v1526
    %v1661 = vadd.f32 %v1597, %v1598
    %v1662 = vadd.f32 %v1661, %v1599
    %v1663 = vadd.f32 %v1662, %v1600
    %v1664 = vadd.f32 %v1663, %v1601
    %v1665 = vadd.f32 %v1664, %v1602
    %v1666 = vadd.f32 %v1665, %v1603
    %v1667 = vadd.f32 %v1666, %v1604
    %v1668 = vadd.f32 %v1667, %v1605
    %v1669 = vadd.f32 %v1668, %v1606
    %v1670 = vadd.f32 %v1669, %v1607
    %v1671 = vadd.f32 %v1670, %v1608
    %v1672 = vadd.f32 %v1671, %v1609
    %v1673 = vadd.f32 %v1672, %v1610
    %v1674 = vadd.f32 %v1673, %v1611
    %v1675 = vadd.f32 %v1674, %v1612
    %v1676 = vadd.f32 %v1675, %v1613
    %v1677 = vadd.f32 %v1676, %v1614
    %v1678 = vadd.f32 %v1677, %v1615
    %v1679 = vadd.f32 %v1678, %v1616
    %v1680 = vadd.f32 %v1679, %v1617
    %v1681 = vadd.f32 %v1680, %v1618
    %v1682 = vadd.f32 %v1681, %v1619
    %v1683 = vadd.f32 %v1682, %v1620
    %v1684 = vadd.f32 %v1683, %v1621
    %v1685 = vadd.f32 %v1684, %v1622
    %v1686 = vadd.f32 %v1685, %v1623
    %v1687 = vadd.f32 %v1686, %v1624
    %v1688 = vadd.f32 %v1687, %v1625
    %v1689 = vadd.f32 %v1688, %v1626
    %v1690 = vadd.f32 %v1689, %v1627
    %v1691 = vadd.f32 %v1690, %v1628
    %v1692 = vadd.f32 %v1691, %v1629
    %v1693 = vadd.f32 %v1692, %v1630
    %v1694 = vadd.f32 %v1693, %v1631
    %v1695 = vadd.f32 %v1694, %v1632
    %v1696 = vadd.f32 %v1695, %v1633
    %v1697 = vadd.f32 %v1696, %v1634
    %v1698 = vadd.f32 %v1697, %v1635
    %v1699 = vadd.f32 %v1698, %v1636
    %v1700 = vadd.f32 %v1699, %v1637
    %v1701 = vadd.f32 %v1700, %v1638
    %v1702 = vadd.f32 %v1701, %v1639
    %v1703 = vadd.f32 %v1702, %v1640
    %v1704 = vadd.f32 %v1703, %v1641
    %v1705 = vadd.f32 %v1704, %v1642
    %v1706 = vadd.f32 %v1705, %v1643
    %v1707 = vadd.f32 %v1706, %v1644
    %v1708 = vadd.f32 %v1707, %v1645
    %v1709 = vadd.f32 %v1708, %v1646
    %v1710 = vadd.f32 %v1709, %v1647
    %v1711 = vadd.f32 %v1710, %v1648
    %v1712 = vadd.f32 %v1711, %v1649
    %v1713 = vadd.f32 %v1712, %v1650
    %v1714 = vadd.f32 %v1713, %v1651
    %v1715 = vadd.f32 %v1714, %v1652
    %v1716 = vadd.f32 %v1715, %v1653
    %v1717 = vadd.f32 %v1716, %v1654
    %v1718 = vadd.f32 %v1717, %v1655
    %v1719 = vadd.f32 %v1718, %v1656
    %v1720 = vadd.f32 %v1719, %v1657
    %v1721 = vadd.f32 %v1720, %v1658
    %v1722 = vadd.f32 %v1721, %v1659
    %v1723 = vadd.f32 %v1722, %v1660
    %v1724 = vrot.slane %v1723, 4
    %v1725 = vadd.f32 %v1723, %v1724
    %v1726 = vrot.slane %v1725, 2
    %v1727 = vadd.f32 %v1725, %v1726
    %v1728 = vrot.slane %v1727, 1
    %v1729 = vadd.f32 %v1727, %v1728
    %1730 = vst [vmem:[%s3 + $0x1] sm:$0x1] %v1729
  $region17: #{conv_bn.2} parent=0 // pred_fallthru
    _
  // Predicated region
  $region18: #{conv_bn.2} parent=0 // pred_check
    _
  $region19: #{conv_bn.2} parent=0 // pred_check_branch
    %1732 = sbr.rel (0) target = $region21
  $region20: #{conv_bn.2} parent=0 // pred_region
    _
  $region21: #{conv_bn.2} parent=0 // pred_fallthru
    _
  // Predicated region
  $region22: #{conv_bn.2} parent=0 // pred_check
    _
  $region23: #{conv_bn.2} parent=0 // pred_check_branch
    %1734 = sbr.rel (0) target = $region25
  $region24: #{conv_bn.2} parent=0 // pred_region
    _
  $region25: #{conv_bn.2} parent=0 // pred_fallthru
    _
  // Predicated region
  $region26: #{conv_bn.2} parent=0 // pred_check
    _
  $region27: #{conv_bn.2} parent=0 // pred_check_branch
    %1736 = sbr.rel (0) target = $region29
  $region28: #{conv_bn.2} parent=0 // pred_region
    _
  $region29: #{conv_bn.2} parent=0 // pred_fallthru
    _
  // Predicated region
  $region30: #{conv_bn.2} parent=0 // pred_check
    _
  $region31: #{conv_bn.2} parent=0 // pred_check_branch
    %1738 = sbr.rel (0) target = $region33
  $region32: #{conv_bn.2} parent=0 // pred_region
    _
  $region33: #{conv_bn.2} parent=0 // pred_fallthru
    _

</llo_original>
